<compile_context>
chip_gen: v7x
topology: tpu7x:2x2x1
jax: 0.10.0
libtpu: 0.0.40
codegen_flags: <defaults>
</compile_context>

<pallas_src>
import functools

import jax
import jax.numpy as jnp
from jax.experimental import pallas as pl
from jax.experimental.pallas import tpu as pltpu

LEAKY_SLOPE = 0.01        # PyTorch nn.LeakyReLU default negative_slope
BN_EPS = 1e-5

IN_LINEAR = 30
DIMS = [IN_LINEAR, 128, 256, 512, 71]
OUT_FEATURES = DIMS[-1]   # 71 (true model output width)
OUT_PAD = 128             # lane-dense padded output width


# --------------------------------------------------------------------------
# Tiling / chip heuristics
# --------------------------------------------------------------------------
def _round_up(x, m):
    return ((x + m - 1) // m) * m


def _tpu_device_kind():
    try:
        return jax.devices()[0].device_kind.lower()
    except Exception:
        return ""


def _is_v5e(kind):
    # v5e has no bf16 VPU/EUP -> keep element-wise math in f32 there.
    return ("v5 lite" in kind) or ("v5e" in kind) or ("v5litepod" in kind)


def _has_multiple_cores(kind):
    # Chips where a "parallel" grid axis shards across TensorCores.
    return any(tag in kind for tag in ("v7", "v4", "v3"))


def _choose_batch_tile(batch, multi_core):
    """Pick the batch (M) tile.

    * Big tiles amortize the ~0.35us per-grid-step overhead.
    * Multiples of 256 fill the 2x256x256 MXU M dim on v6e/v7x.
    * On multi-core chips make sure there are >= 2 tiles so the "parallel"
      grid axis actually uses both TensorCores.
    """
    b = _round_up(max(batch, 1), 128)
    max_tile = 1024 if b >= 8192 else 512
    tile = min(max_tile, b)
    if multi_core and b >= 256:
        tile = min(tile, _round_up((b + 1) // 2, 128))
    if tile >= 256:
        tile = (tile // 256) * 256
    return max(128, tile)


# --------------------------------------------------------------------------
# Kernel
# --------------------------------------------------------------------------
def netg7_kernel(x_ref,
                 w1_ref, b1_ref,
                 w2_ref, b2_ref,
                 w3_ref, b3_ref,
                 w4_ref, b4_ref,
                 o_ref, *, compute_dtype):
    """Fused 4-layer MLP tile: 4 bf16 MXU matmuls (f32 acc), bias + LeakyReLU
    in `compute_dtype` (bf16 on v6e/v7x, f32 on v5e), final bias + tanh in
    f32, one lane-dense (TB, OUT_PAD) store."""

    def leaky(h):
        return jnp.where(h >= 0, h, LEAKY_SLOPE * h)

    def matmul(h, w_ref):
        # bf16 operands on the MXU, f32 accumulation.
        return jnp.dot(h.astype(jnp.bfloat16), w_ref[...],
                       preferred_element_type=jnp.float32)

    h = leaky(matmul(x_ref[...], w1_ref).astype(compute_dtype) + b1_ref[...])
    h = leaky(matmul(h, w2_ref).astype(compute_dtype) + b2_ref[...])
    h = leaky(matmul(h, w3_ref).astype(compute_dtype) + b3_ref[...])
    # Final layer: keep bias add + tanh in f32 to preserve output precision.
    h = matmul(h, w4_ref) + b4_ref[...]
    o_ref[...] = jnp.tanh(h).astype(o_ref.dtype)


# --------------------------------------------------------------------------
# Parameters (BN folded into each Linear)
# --------------------------------------------------------------------------
def fold_batchnorm(w, b, running_mean, running_var, gamma, beta, eps=BN_EPS):
    """Fold an inference-mode BatchNorm1d into the preceding Linear.
    y = gamma*(xW + b - mean)/sqrt(var+eps) + beta."""
    scale = gamma * jax.lax.rsqrt(running_var + eps)
    return w * scale[None, :], (b - running_mean) * scale + beta


def init_params(key):
    """PyTorch-like init (uniform +/- 1/sqrt(fan_in)) with default-state BN
    folded into each Linear.  Returns f32 (w, b) pairs; the final layer is
    zero-padded 71 -> OUT_PAD for lane-dense stores.  The wrapper casts to
    the kernel dtypes (weights bf16, biases bf16/f32)."""
    params = []
    for d_in, d_out in zip(DIMS[:-1], DIMS[1:]):
        key, kw, kb = jax.random.split(key, 3)
        bound = 1.0 / (d_in ** 0.5)
        w = jax.random.uniform(kw, (d_in, d_out), jnp.float32, -bound, bound)
        b = jax.random.uniform(kb, (d_out,), jnp.float32, -bound, bound)
        # Default (untrained) BN stats; replace with checkpoint stats if any.
        mean = jnp.zeros((d_out,), jnp.float32)
        var = jnp.ones((d_out,), jnp.float32)
        gamma = jnp.ones((d_out,), jnp.float32)
        beta = jnp.zeros((d_out,), jnp.float32)
        w_f, b_f = fold_batchnorm(w, b, mean, var, gamma, beta)
        if d_out == OUT_FEATURES:  # pad last layer to a lane-dense width
            pad = OUT_PAD - d_out
            w_f = jnp.pad(w_f, ((0, 0), (0, pad)))
            b_f = jnp.pad(b_f, ((0, pad),))
        params.append((w_f, b_f))
    return params


# --------------------------------------------------------------------------
# Wrapper
# --------------------------------------------------------------------------
def netg7_forward(x, params, *, batch_tile=None, slice_output=True):
    """x: (B, 30) float32 -> (B, 1, 71) float32.

    With slice_output=False the raw padded (B_pad, OUT_PAD) f32 buffer is
    returned (rows >= B and lanes >= 71 are padding); this avoids an extra
    XLA copy that would re-touch the whole output in HBM.
    """
    B = x.shape[0]
    kind = _tpu_device_kind()
    compute_dtype = jnp.float32 if _is_v5e(kind) else jnp.bfloat16
    if batch_tile is None:
        batch_tile = _choose_batch_tile(B, _has_multiple_cores(kind))

    num_tiles = pl.cdiv(B, batch_tile)
    B_pad = num_tiles * batch_tile

    # bf16 input: halves the x DMA and matches the MXU operand dtype.
    x = x.astype(jnp.bfloat16)
    if B_pad != B:
        x = jnp.pad(x, ((0, B_pad - B), (0, 0)))

    # Weights bf16 (MXU operands); hidden-layer biases in the element-wise
    # compute dtype; final-layer bias stays f32 (f32 bias + tanh path).
    flat_params = []
    n_layers = len(params)
    for i, (w, b) in enumerate(params):
        b_dtype = jnp.float32 if i == n_layers - 1 else compute_dtype
        flat_params.append(w.astype(jnp.bfloat16))
        flat_params.append(b.reshape(1, -1).astype(b_dtype))

    def resident_spec(shape):
        # Full-array block, constant index_map -> DMA'd once, VMEM resident.
        return pl.BlockSpec(shape, lambda i: (0,) * len(shape))

    in_specs = [pl.BlockSpec((batch_tile, IN_LINEAR), lambda i: (i, 0))]
    in_specs += [resident_spec(p.shape) for p in flat_params]
    out_spec = pl.BlockSpec((batch_tile, OUT_PAD), lambda i: (i, 0))

    matmul_flops = 2 * B_pad * sum(
        d_in * d_out for d_in, d_out in
        zip(DIMS[:-1], [128, 256, 512, OUT_PAD]))
    bytes_accessed = (
        int(x.size) * x.dtype.itemsize                       # x (bf16)
        + sum(int(p.size) * p.dtype.itemsize for p in flat_params)
        + B_pad * OUT_PAD * 4)                               # out (f32)

    kernel = functools.partial(netg7_kernel, compute_dtype=compute_dtype)

    out = pl.pallas_call(
        kernel,
        out_shape=jax.ShapeDtypeStruct((B_pad, OUT_PAD), jnp.float32),
        grid=(num_tiles,),
        in_specs=in_specs,
        out_specs=out_spec,
        compiler_params=pltpu.CompilerParams(
            dimension_semantics=("parallel",),
            vmem_limit_bytes=32 * 1024 * 1024),
        cost_estimate=pl.CostEstimate(
            flops=matmul_flops,
            transcendentals=B_pad * OUT_PAD,
            bytes_accessed=bytes_accessed),
    )(x, *flat_params)

    if not slice_output:
        return out
    # Slice padded rows/lanes away and apply x.unsqueeze(1).
    return out[:B, None, :OUT_FEATURES]


# --------------------------------------------------------------------------
# Pure-JAX reference (same bf16 weight rounding as the kernel)
# --------------------------------------------------------------------------
def netg7_reference(x, params):
    h = x.astype(jnp.float32)
    n_layers = len(params)
    for i, (w, b) in enumerate(params):
        w_r = w.astype(jnp.bfloat16).astype(jnp.float32)
        h = h @ w_r + b
        if i < n_layers - 1:
            h = jnp.where(h >= 0, h, LEAKY_SLOPE * h)
        else:
            h = jnp.tanh(h)
    return h[:, None, :OUT_FEATURES]


if __name__ == "__main__":
    key = jax.random.PRNGKey(0)
    k_x, k_p, k_x2 = jax.random.split(key, 3)

    params = init_params(k_p)

    # Small-batch check: module semantics (B, 30) -> (B, 1, 71).
    batch_size = 8
    x = jax.random.normal(k_x, (batch_size, IN_LINEAR), jnp.float32)
    y = netg7_forward(x, params)
    jax.block_until_ready(y)

    assert y.shape == (batch_size, 1, OUT_FEATURES), y.shape
    assert bool(jnp.all(jnp.isfinite(y)))
    assert bool(jnp.all(jnp.abs(y) <= 1.0))       # tanh range
    y_ref = netg7_reference(x, params)
    assert float(jnp.max(jnp.abs(y - y_ref))) < 0.1

    # Multi-tile check: exercises grid > 1, batch padding, parallel sharding.
    x2 = jax.random.normal(k_x2, (300, IN_LINEAR), jnp.float32)
    y2 = netg7_forward(x2, params, batch_tile=128)
    jax.block_until_ready(y2)
    assert y2.shape == (300, 1, OUT_FEATURES), y2.shape
    y2_ref = netg7_reference(x2, params)
    assert float(jnp.max(jnp.abs(y2 - y2_ref))) < 0.1

    print("KERNEL_OK")
</pallas_src>

<mosaic_0001>
module attributes {stable_mosaic.version = 11 : i64} {
  func.func @netg7_kernel(%arg0: i32, %arg1: memref<128x30xbf16, #tpu.memory_space<vmem>>, %arg2: memref<30x128xbf16, #tpu.memory_space<vmem>>, %arg3: memref<1x128xbf16, #tpu.memory_space<vmem>>, %arg4: memref<128x256xbf16, #tpu.memory_space<vmem>>, %arg5: memref<1x256xbf16, #tpu.memory_space<vmem>>, %arg6: memref<256x512xbf16, #tpu.memory_space<vmem>>, %arg7: memref<1x512xbf16, #tpu.memory_space<vmem>>, %arg8: memref<512x128xbf16, #tpu.memory_space<vmem>>, %arg9: memref<1x128xf32, #tpu.memory_space<vmem>>, %arg10: memref<128x128xf32, #tpu.memory_space<vmem>>) attributes {dimension_semantics = [#tpu.dimension_semantics<parallel>], iteration_bounds = array<i64: 1>, scalar_prefetch = 0 : i64, scratch_operands = 0 : i64, tpu.core_type = #tpu.core_type<tc>, window_params = [{transform_indices = @transform_0, window_bounds = array<i64: 128, 30>}, {pipeline_mode = #tpu.pipeline_mode<synchronous>, transform_indices = @transform_1, window_bounds = array<i64: 30, 128>}, {pipeline_mode = #tpu.pipeline_mode<synchronous>, transform_indices = @transform_2, window_bounds = array<i64: 1, 128>}, {pipeline_mode = #tpu.pipeline_mode<synchronous>, transform_indices = @transform_3, window_bounds = array<i64: 128, 256>}, {pipeline_mode = #tpu.pipeline_mode<synchronous>, transform_indices = @transform_4, window_bounds = array<i64: 1, 256>}, {pipeline_mode = #tpu.pipeline_mode<synchronous>, transform_indices = @transform_5, window_bounds = array<i64: 256, 512>}, {pipeline_mode = #tpu.pipeline_mode<synchronous>, transform_indices = @transform_6, window_bounds = array<i64: 1, 512>}, {pipeline_mode = #tpu.pipeline_mode<synchronous>, transform_indices = @transform_7, window_bounds = array<i64: 512, 128>}, {pipeline_mode = #tpu.pipeline_mode<synchronous>, transform_indices = @transform_8, window_bounds = array<i64: 1, 128>}, {transform_indices = @transform_9, window_bounds = array<i64: 128, 128>}]} {
    %c0 = arith.constant 0 : index
    %c0_0 = arith.constant 0 : index
    %0 = vector.load %arg1[%c0, %c0_0] : memref<128x30xbf16, #tpu.memory_space<vmem>>, vector<128x30xbf16>
    %c0_1 = arith.constant 0 : index
    %c0_2 = arith.constant 0 : index
    %1 = vector.load %arg2[%c0_1, %c0_2] : memref<30x128xbf16, #tpu.memory_space<vmem>>, vector<30x128xbf16>
    %cst = arith.constant dense<0.000000e+00> : vector<128x128xf32>
    %2 = tpu.matmul %0, %1, %cst {dimension_numbers = #tpu.dot_dimension_numbers<[1], [0], [0], [1], [0, 0, 1, 1], [], []>} : vector<128x30xbf16>, vector<30x128xbf16>, vector<128x128xf32> -> vector<128x128xf32>
    %3 = arith.truncf %2 : vector<128x128xf32> to vector<128x128xbf16>
    %c0_3 = arith.constant 0 : index
    %c0_4 = arith.constant 0 : index
    %4 = vector.load %arg3[%c0_3, %c0_4] : memref<1x128xbf16, #tpu.memory_space<vmem>>, vector<1x128xbf16>
    %5 = vector.broadcast %4 : vector<1x128xbf16> to vector<128x128xbf16>
    %6 = arith.addf %3, %5 : vector<128x128xbf16>
    %cst_5 = arith.constant 0.000000e+00 : bf16
    %7 = vector.broadcast %cst_5 : bf16 to vector<128x128xbf16>
    %8 = arith.cmpf oge, %6, %7 : vector<128x128xbf16>
    %cst_6 = arith.constant 1.000980e-02 : bf16
    %9 = vector.broadcast %cst_6 : bf16 to vector<128x128xbf16>
    %10 = arith.mulf %9, %6 : vector<128x128xbf16>
    %11 = arith.select %8, %6, %10 : vector<128x128xi1>, vector<128x128xbf16>
    %c0_7 = arith.constant 0 : index
    %c0_8 = arith.constant 0 : index
    %12 = vector.load %arg4[%c0_7, %c0_8] : memref<128x256xbf16, #tpu.memory_space<vmem>>, vector<128x256xbf16>
    %cst_9 = arith.constant dense<0.000000e+00> : vector<128x256xf32>
    %13 = tpu.matmul %11, %12, %cst_9 {dimension_numbers = #tpu.dot_dimension_numbers<[1], [0], [0], [1], [0, 0, 1, 1], [], []>} : vector<128x128xbf16>, vector<128x256xbf16>, vector<128x256xf32> -> vector<128x256xf32>
    %14 = arith.truncf %13 : vector<128x256xf32> to vector<128x256xbf16>
    %c0_10 = arith.constant 0 : index
    %c0_11 = arith.constant 0 : index
    %15 = vector.load %arg5[%c0_10, %c0_11] : memref<1x256xbf16, #tpu.memory_space<vmem>>, vector<1x256xbf16>
    %16 = vector.broadcast %15 : vector<1x256xbf16> to vector<128x256xbf16>
    %17 = arith.addf %14, %16 : vector<128x256xbf16>
    %cst_12 = arith.constant 0.000000e+00 : bf16
    %18 = vector.broadcast %cst_12 : bf16 to vector<128x256xbf16>
    %19 = arith.cmpf oge, %17, %18 : vector<128x256xbf16>
    %cst_13 = arith.constant 1.000980e-02 : bf16
    %20 = vector.broadcast %cst_13 : bf16 to vector<128x256xbf16>
    %21 = arith.mulf %20, %17 : vector<128x256xbf16>
    %22 = arith.select %19, %17, %21 : vector<128x256xi1>, vector<128x256xbf16>
    %c0_14 = arith.constant 0 : index
    %c0_15 = arith.constant 0 : index
    %23 = vector.load %arg6[%c0_14, %c0_15] : memref<256x512xbf16, #tpu.memory_space<vmem>>, vector<256x512xbf16>
    %cst_16 = arith.constant dense<0.000000e+00> : vector<128x512xf32>
    %24 = tpu.matmul %22, %23, %cst_16 {dimension_numbers = #tpu.dot_dimension_numbers<[1], [0], [0], [1], [0, 0, 1, 1], [], []>} : vector<128x256xbf16>, vector<256x512xbf16>, vector<128x512xf32> -> vector<128x512xf32>
    %25 = arith.truncf %24 : vector<128x512xf32> to vector<128x512xbf16>
    %c0_17 = arith.constant 0 : index
    %c0_18 = arith.constant 0 : index
    %26 = vector.load %arg7[%c0_17, %c0_18] : memref<1x512xbf16, #tpu.memory_space<vmem>>, vector<1x512xbf16>
    %27 = vector.broadcast %26 : vector<1x512xbf16> to vector<128x512xbf16>
    %28 = arith.addf %25, %27 : vector<128x512xbf16>
    %cst_19 = arith.constant 0.000000e+00 : bf16
    %29 = vector.broadcast %cst_19 : bf16 to vector<128x512xbf16>
    %30 = arith.cmpf oge, %28, %29 : vector<128x512xbf16>
    %cst_20 = arith.constant 1.000980e-02 : bf16
    %31 = vector.broadcast %cst_20 : bf16 to vector<128x512xbf16>
    %32 = arith.mulf %31, %28 : vector<128x512xbf16>
    %33 = arith.select %30, %28, %32 : vector<128x512xi1>, vector<128x512xbf16>
    %c0_21 = arith.constant 0 : index
    %c0_22 = arith.constant 0 : index
    %34 = vector.load %arg8[%c0_21, %c0_22] : memref<512x128xbf16, #tpu.memory_space<vmem>>, vector<512x128xbf16>
    %cst_23 = arith.constant dense<0.000000e+00> : vector<128x128xf32>
    %35 = tpu.matmul %33, %34, %cst_23 {dimension_numbers = #tpu.dot_dimension_numbers<[1], [0], [0], [1], [0, 0, 1, 1], [], []>} : vector<128x512xbf16>, vector<512x128xbf16>, vector<128x128xf32> -> vector<128x128xf32>
    %c0_24 = arith.constant 0 : index
    %c0_25 = arith.constant 0 : index
    %36 = vector.load %arg9[%c0_24, %c0_25] : memref<1x128xf32, #tpu.memory_space<vmem>>, vector<1x128xf32>
    %37 = vector.broadcast %36 : vector<1x128xf32> to vector<128x128xf32>
    %38 = arith.addf %35, %37 : vector<128x128xf32>
    %39 = math.tanh %38 : vector<128x128xf32>
    %c0_26 = arith.constant 0 : index
    %c0_27 = arith.constant 0 : index
    %40 = vector.load %arg10[%c0_26, %c0_27] : memref<128x128xf32, #tpu.memory_space<vmem>>, vector<128x128xf32>
    tpu.vector_store %arg10[%c0_26, %c0_27], %39 {strides = array<i32>} : memref<128x128xf32, #tpu.memory_space<vmem>>, vector<128x128xf32>,
    return
  }
  func.func @transform_0(%arg0: i32) -> (i32, i32) {
    %c0_i32 = arith.constant 0 : i32
    %c0_i32_0 = arith.constant 0 : i32
    return %arg0, %c0_i32 : i32, i32
  }
  func.func @transform_1(%arg0: i32) -> (i32, i32) {
    %c0_i32 = arith.constant 0 : i32
    %c0_i32_0 = arith.constant 0 : i32
    %c0_i32_1 = arith.constant 0 : i32
    return %c0_i32, %c0_i32_0 : i32, i32
  }
  func.func @transform_2(%arg0: i32) -> (i32, i32) {
    %c0_i32 = arith.constant 0 : i32
    %c0_i32_0 = arith.constant 0 : i32
    %c0_i32_1 = arith.constant 0 : i32
    return %c0_i32, %c0_i32_0 : i32, i32
  }
  func.func @transform_3(%arg0: i32) -> (i32, i32) {
    %c0_i32 = arith.constant 0 : i32
    %c0_i32_0 = arith.constant 0 : i32
    %c0_i32_1 = arith.constant 0 : i32
    return %c0_i32, %c0_i32_0 : i32, i32
  }
  func.func @transform_4(%arg0: i32) -> (i32, i32) {
    %c0_i32 = arith.constant 0 : i32
    %c0_i32_0 = arith.constant 0 : i32
    %c0_i32_1 = arith.constant 0 : i32
    return %c0_i32, %c0_i32_0 : i32, i32
  }
  func.func @transform_5(%arg0: i32) -> (i32, i32) {
    %c0_i32 = arith.constant 0 : i32
    %c0_i32_0 = arith.constant 0 : i32
    %c0_i32_1 = arith.constant 0 : i32
    return %c0_i32, %c0_i32_0 : i32, i32
  }
  func.func @transform_6(%arg0: i32) -> (i32, i32) {
    %c0_i32 = arith.constant 0 : i32
    %c0_i32_0 = arith.constant 0 : i32
    %c0_i32_1 = arith.constant 0 : i32
    return %c0_i32, %c0_i32_0 : i32, i32
  }
  func.func @transform_7(%arg0: i32) -> (i32, i32) {
    %c0_i32 = arith.constant 0 : i32
    %c0_i32_0 = arith.constant 0 : i32
    %c0_i32_1 = arith.constant 0 : i32
    return %c0_i32, %c0_i32_0 : i32, i32
  }
  func.func @transform_8(%arg0: i32) -> (i32, i32) {
    %c0_i32 = arith.constant 0 : i32
    %c0_i32_0 = arith.constant 0 : i32
    %c0_i32_1 = arith.constant 0 : i32
    return %c0_i32, %c0_i32_0 : i32, i32
  }
  func.func @transform_9(%arg0: i32) -> (i32, i32) {
    %c0_i32 = arith.constant 0 : i32
    %c0_i32_0 = arith.constant 0 : i32
    return %arg0, %c0_i32 : i32, i32
  }
}

</mosaic_0001>

<llo_original>
// kernel: tpu_custom_call.1
$region0: #{tpu_custom_call.1}
  #allocation0 [shape = 'u32[]', space=smem, size = 0x4, offset = 0x4, fixed_abs, tag = 'smem constant byte address 0x4 - core index']
  #allocation1 [shape = 'u32[144,128]{1,0:T(1,128)}', space=vmem, size = 0x12000, scoped, tag = 'internal scratch']
  %s0 = inlined_call_operand.vmem [shape: bf16[128,30], index: 0, kind: input, shape index: {}]
  %s1 = inlined_call_operand.vmem [shape: bf16[30,128], index: 1, kind: input, shape index: {}]
  %s2 = inlined_call_operand.vmem [shape: bf16[1,128], index: 2, kind: input, shape index: {}]
  %s3 = inlined_call_operand.hbm [shape: bf16[128,256], index: 3, kind: input, shape index: {}]
  %s4 = inlined_call_operand.vmem [shape: bf16[1,256], index: 4, kind: input, shape index: {}]
  %s5 = inlined_call_operand.hbm [shape: bf16[256,512], index: 5, kind: input, shape index: {}]
  %s6 = inlined_call_operand.vmem [shape: bf16[1,512], index: 6, kind: input, shape index: {}]
  %s7 = inlined_call_operand.hbm [shape: bf16[512,128], index: 7, kind: input, shape index: {}]
  %s8 = inlined_call_operand.vmem [shape: f32[1,128], index: 8, kind: input, shape index: {}]
  %s9 = inlined_call_operand.hbm [shape: f32[128,128], index: 9, kind: output, shape index: {}]
  %s10 = sld [smem:[#allocation0]]
  $region58: #{tpu_custom_call.1} parent=0
    _
  %s12 = ssub.s32 1, %s10
  %s13 = scalar_select 0, %s12, %s10
  $region1: #{tpu_custom_call.1} parent=0
    #allocation2 [shape = 'u8[65536]{0}', space=vmem, size = 0x10000, scoped, tag = 'input window, operand 3, single buffered']
    #allocation3 [shape = 's32[1]{0}', space=sflag, size = 0x4, scoped, tag = 'scoped memory for tpu_custom_call.1']
    #allocation4 [shape = 's32[1]{0}', space=sflag, size = 0x4, scoped, tag = 'scoped memory for tpu_custom_call.1']
    #allocation5 [shape = 'u8[262144]{0}', space=vmem, size = 0x40000, scoped, tag = 'input window, operand 5, single buffered']
    #allocation6 [shape = 's32[1]{0}', space=sflag, size = 0x4, scoped, tag = 'scoped memory for tpu_custom_call.1']
    #allocation7 [shape = 'u8[131072]{0}', space=vmem, size = 0x20000, scoped, tag = 'input window, operand 7, single buffered']
    #allocation8 [shape = 'u8[65536]{0}', space=vmem, size = 0x10000, scoped, tag = 'output window, operand 0, single buffered']
    %14 = vsyncpa [#allocation3], 0
    %15 = vsyncpa [#allocation6], 0
    %16 = vsyncpa [#allocation4], 0
    // Predicated region
    $region2: #{tpu_custom_call.1} parent=1 // pred_check
      _
    $region3: #{tpu_custom_call.1} parent=1 // pred_check_branch
      %18 = sbr.rel (0) target = $region5
    $region4: #{tpu_custom_call.1} parent=1 // pred_region
      _
    $region5: #{tpu_custom_call.1} parent=1 // pred_fallthru
      _
    // Predicated region
    $region6: #{tpu_custom_call.1} parent=1 // pred_check
      _
    $region7: #{tpu_custom_call.1} parent=1 // pred_check_branch
      %20 = sbr.rel (0) target = $region9
    $region8: #{tpu_custom_call.1} parent=1 // pred_region
      _
    $region9: #{tpu_custom_call.1} parent=1 // pred_fallthru
      _
    // Predicated region
    $region10: #{tpu_custom_call.1} parent=1 // pred_check
      _
    $region11: #{tpu_custom_call.1} parent=1 // pred_check_branch
      %22 = sbr.rel (0) target = $region13
    $region12: #{tpu_custom_call.1} parent=1 // pred_region
      _
    $region13: #{tpu_custom_call.1} parent=1 // pred_fallthru
      _
    // Predicated region
    $region14: #{tpu_custom_call.1} parent=1 // pred_check
      _
    $region15: #{tpu_custom_call.1} parent=1 // pred_check_branch
      %24 = sbr.rel (0) target = $region17
    $region16: #{tpu_custom_call.1} parent=1 // pred_region
      %s26 = ssub.s32 2048, 2048
      %27 = vsyncadd [#allocation3], %s26
      %s28 = sshll.u32 [#allocation2], 4
      %s29 = int_to_ptr.vmem [resolvable:$true] %s28
      %34 = dma.hbm_to_vmem [thread:$0]  %s3, 2048, %s29, [#allocation3], 128, 128, 8
    $region17: #{tpu_custom_call.1} parent=1 // pred_fallthru
      _
    // Predicated region
    $region18: #{tpu_custom_call.1} parent=1 // pred_check
      _
    $region19: #{tpu_custom_call.1} parent=1 // pred_check_branch
      %36 = sbr.rel (0) target = $region21
    $region20: #{tpu_custom_call.1} parent=1 // pred_region
      _
    $region21: #{tpu_custom_call.1} parent=1 // pred_fallthru
      _
    // Predicated region
    $region22: #{tpu_custom_call.1} parent=1 // pred_check
      _
    $region23: #{tpu_custom_call.1} parent=1 // pred_check_branch
      %38 = sbr.rel (0) target = $region25
    $region24: #{tpu_custom_call.1} parent=1 // pred_region
      %s40 = ssub.s32 8192, 8192
      %41 = vsyncadd [#allocation6], %s40
      %s42 = sshll.u32 [#allocation5], 4
      %s43 = int_to_ptr.vmem [resolvable:$true] %s42
      %48 = dma.hbm_to_vmem [thread:$0]  %s5, 8192, %s43, [#allocation6], 256, 256, 16
    $region25: #{tpu_custom_call.1} parent=1 // pred_fallthru
      _
    // Predicated region
    $region26: #{tpu_custom_call.1} parent=1 // pred_check
      _
    $region27: #{tpu_custom_call.1} parent=1 // pred_check_branch
      %50 = sbr.rel (0) target = $region29
    $region28: #{tpu_custom_call.1} parent=1 // pred_region
      _
    $region29: #{tpu_custom_call.1} parent=1 // pred_fallthru
      _
    // Predicated region
    $region30: #{tpu_custom_call.1} parent=1 // pred_check
      _
    $region31: #{tpu_custom_call.1} parent=1 // pred_check_branch
      %52 = sbr.rel (0) target = $region33
    $region32: #{tpu_custom_call.1} parent=1 // pred_region
      %s54 = ssub.s32 4096, 4096
      %55 = vsyncadd [#allocation6], %s54
      %s56 = sshll.u32 [#allocation7], 4
      %s57 = int_to_ptr.vmem [resolvable:$true] %s56
      %62 = dma.hbm_to_vmem [thread:$0]  %s7, 4096, %s57, [#allocation6], 64, 64, 4
    $region33: #{tpu_custom_call.1} parent=1 // pred_fallthru
      _
    // Predicated region
    $region34: #{tpu_custom_call.1} parent=1 // pred_check
      _
    $region35: #{tpu_custom_call.1} parent=1 // pred_check_branch
      %64 = sbr.rel (0) target = $region37
    $region36: #{tpu_custom_call.1} parent=1 // pred_region
      _
    $region37: #{tpu_custom_call.1} parent=1 // pred_fallthru
      _
    // Predicated region
    $region38: #{tpu_custom_call.1} parent=1 // pred_check
      _
    $region39: #{tpu_custom_call.1} parent=1 // pred_check_branch
      %66 = sbr.rel (0) target = $region41
    $region40: #{tpu_custom_call.1} parent=1 // pred_region
      %67 = dma.done [#allocation3], 2048
    $region41: #{tpu_custom_call.1} parent=1 // pred_fallthru
      _
    // Predicated region
    $region42: #{tpu_custom_call.1} parent=1 // pred_check
      _
    $region43: #{tpu_custom_call.1} parent=1 // pred_check_branch
      %69 = sbr.rel (0) target = $region45
    $region44: #{tpu_custom_call.1} parent=1 // pred_region
      %70 = dma.done [#allocation6], 8192
    $region45: #{tpu_custom_call.1} parent=1 // pred_fallthru
      _
    // Predicated region
    $region46: #{tpu_custom_call.1} parent=1 // pred_check
      _
    $region47: #{tpu_custom_call.1} parent=1 // pred_check_branch
      %72 = sbr.rel (0) target = $region49
    $region48: #{tpu_custom_call.1} parent=1 // pred_region
      %73 = dma.done [#allocation6], 4096
    $region49: #{tpu_custom_call.1} parent=1 // pred_fallthru
      _
    %v76 = vld [vmem:[%s0] sm:$0xf]
    %v77 = vld [vmem:[%s0 + $0x4] sm:$0xf]
    %v78 = vld [vmem:[%s0 + $0x8] sm:$0xf]
    %v79 = vld [vmem:[%s0 + $0xc] sm:$0xf]
    %v80 = vld [vmem:[%s0 + $0x10] sm:$0xf]
    %v81 = vld [vmem:[%s0 + $0x14] sm:$0xf]
    %v82 = vld [vmem:[%s0 + $0x18] sm:$0xf]
    %v83 = vld [vmem:[%s0 + $0x1c] sm:$0xf]
    %v84 = vld [vmem:[%s0 + $0x20] sm:$0xf]
    %v85 = vld [vmem:[%s0 + $0x24] sm:$0xf]
    %v86 = vld [vmem:[%s0 + $0x28] sm:$0xf]
    %v87 = vld [vmem:[%s0 + $0x2c] sm:$0xf]
    %v88 = vld [vmem:[%s0 + $0x30] sm:$0xf]
    %v89 = vld [vmem:[%s0 + $0x34] sm:$0xf]
    %v90 = vld [vmem:[%s0 + $0x38] sm:$0xf]
    %v91 = vld [vmem:[%s0 + $0x3c] sm:$0xf]
    %v92 = vld [vmem:[%s1] sm:$0xf]
    %v93 = vld [vmem:[%s1 + $0x4] sm:$0xf]
    %v94 = vld [vmem:[%s1 + $0x8] sm:$0xf]
    %v95 = vld [vmem:[%s1 + $0xc] sm:$0x7]
    %v112 = vunpack.c.l.b16 %v76
    %v113 = vunpack.c.l.b16 %v77
    %v114 = vunpack.c.l.b16 %v78
    %v115 = vunpack.c.l.b16 %v79
    %v116 = vunpack.c.l.b16 %v80
    %v117 = vunpack.c.l.b16 %v81
    %v118 = vunpack.c.l.b16 %v82
    %v119 = vunpack.c.l.b16 %v83
    %v120 = vunpack.c.l.b16 %v84
    %v121 = vunpack.c.l.b16 %v85
    %v122 = vunpack.c.l.b16 %v86
    %v123 = vunpack.c.l.b16 %v87
    %v124 = vunpack.c.l.b16 %v88
    %v125 = vunpack.c.l.b16 %v89
    %v126 = vunpack.c.l.b16 %v90
    %v127 = vunpack.c.l.b16 %v91
    %v128 = vpack.c.b16 %v113, %v112
    %v129 = vpack.c.b16 %v115, %v114
    %v130 = vpack.c.b16 %v117, %v116
    %v131 = vpack.c.b16 %v119, %v118
    %v132 = vpack.c.b16 %v121, %v120
    %v133 = vpack.c.b16 %v123, %v122
    %v134 = vpack.c.b16 %v125, %v124
    %v135 = vpack.c.b16 %v127, %v126
    %v140 = vunpack.c.l.b16 %v92
    %v141 = vunpack.c.l.b16 %v93
    %v142 = vunpack.c.l.b16 %v94
    %v143 = vunpack.c.l.b16 %v95
    %v144 = vpack.c.b16 %v141, %v140
    %v145 = vpack.c.b16 %v143, %v142
    %vm147 = vcmask 244736
    %v149 = vsel %vm147, %v128, 0
    %v152 = vsel %vm147, %v129, 0
    %v155 = vsel %vm147, %v130, 0
    %v158 = vsel %vm147, %v131, 0
    %v161 = vsel %vm147, %v132, 0
    %v164 = vsel %vm147, %v133, 0
    %v167 = vsel %vm147, %v134, 0
    %v170 = vsel %vm147, %v135, 0
    %vm172 = vcmask 1046528
    %v174 = vsel %vm172, %v145, 0
    %176 = vmatprep.subr.bf16.mxu0 0
    %177 = vmatpush1.bf16.msra.mxu0 %v144
    %178 = vmatprep.subr.bf16.mxu0 0
    %179 = vmatpush1.bf16.msra.mxu0 %v174
    %180 = vmatprep.subr.bf16.mxu0 0
    %181 = vmatpush1.bf16.msra.mxu0 0
    %182 = vmatprep.subr.bf16.mxu0 0
    %183 = vmatpush1.bf16.msra.mxu0 0
    %184 = vmatprep.subr.bf16.mxu0 0
    %185 = vmatpush1.bf16.msra.mxu0 0
    %186 = vmatprep.subr.bf16.mxu0 0
    %187 = vmatpush1.bf16.msra.mxu0 0
    %188 = vmatprep.subr.bf16.mxu0 0
    %189 = vmatpush1.bf16.msra.mxu0 0
    %190 = vmatprep.subr.bf16.mxu0 0
    %191 = vmatpush1.bf16.msra.mxu0 0
    %192 = vmatprep.subr.bf16.mxu0 0
    %193 = vmatpush1.bf16.msra.mxu0 0
    %194 = vmatprep.subr.bf16.mxu0 0
    %195 = vmatpush1.bf16.msra.mxu0 0
    %196 = vmatprep.subr.bf16.mxu0 0
    %197 = vmatpush1.bf16.msra.mxu0 0
    %198 = vmatprep.subr.bf16.mxu0 0
    %199 = vmatpush1.bf16.msra.mxu0 0
    %200 = vmatprep.subr.bf16.mxu0 0
    %201 = vmatpush1.bf16.msra.mxu0 0
    %202 = vmatprep.subr.bf16.mxu0 0
    %203 = vmatpush1.bf16.msra.mxu0 0
    %204 = vmatprep.subr.bf16.mxu0 0
    %205 = vmatpush1.bf16.msra.mxu0 0
    %206 = vmatprep.subr.bf16.mxu0 0
    %207 = vmatpush1.bf16.msra.mxu0 0
    %208 = vmatprep.mubr.bf16.mxu0 0
    %209 = vmatmul.mubr.bf16.gmra.mrb[0].mxu0 %v149
    %v210 = vpop.f32.mrb[0].mxu0
    %v211 = vadd.f32 0.0, %v210
    %v212 = vpop.f32.mrb[0].mxu0
    %v213 = vpop.f32.mrb[0].mxu0
    %v214 = vadd.f32 0.0, %v213
    %v215 = vpop.f32.mrb[0].mxu0
    %216 = vmatprep.mubr.bf16.mxu0 0
    %217 = vmatmul.mubr.bf16.gmra.mrb[0].mxu0 %v152
    %v218 = vpop.f32.mrb[0].mxu0
    %v219 = vadd.f32 0.0, %v218
    %v220 = vpop.f32.mrb[0].mxu0
    %v221 = vpop.f32.mrb[0].mxu0
    %v222 = vadd.f32 0.0, %v221
    %v223 = vpop.f32.mrb[0].mxu0
    %224 = vmatprep.mubr.bf16.mxu0 0
    %225 = vmatmul.mubr.bf16.gmra.mrb[0].mxu0 %v155
    %v226 = vpop.f32.mrb[0].mxu0
    %v227 = vadd.f32 0.0, %v226
    %v228 = vpop.f32.mrb[0].mxu0
    %v229 = vpop.f32.mrb[0].mxu0
    %v230 = vadd.f32 0.0, %v229
    %v231 = vpop.f32.mrb[0].mxu0
    %232 = vmatprep.mubr.bf16.mxu0 0
    %233 = vmatmul.mubr.bf16.gmra.mrb[0].mxu0 %v158
    %v234 = vpop.f32.mrb[0].mxu0
    %v235 = vadd.f32 0.0, %v234
    %v236 = vpop.f32.mrb[0].mxu0
    %v237 = vpop.f32.mrb[0].mxu0
    %v238 = vadd.f32 0.0, %v237
    %v239 = vpop.f32.mrb[0].mxu0
    %240 = vmatprep.mubr.bf16.mxu0 0
    %241 = vmatmul.mubr.bf16.gmra.mrb[0].mxu0 %v161
    %v242 = vpop.f32.mrb[0].mxu0
    %v243 = vadd.f32 0.0, %v242
    %v244 = vpop.f32.mrb[0].mxu0
    %v245 = vpop.f32.mrb[0].mxu0
    %v246 = vadd.f32 0.0, %v245
    %v247 = vpop.f32.mrb[0].mxu0
    %248 = vmatprep.mubr.bf16.mxu0 0
    %249 = vmatmul.mubr.bf16.gmra.mrb[0].mxu0 %v164
    %v250 = vpop.f32.mrb[0].mxu0
    %v251 = vadd.f32 0.0, %v250
    %v252 = vpop.f32.mrb[0].mxu0
    %v253 = vpop.f32.mrb[0].mxu0
    %v254 = vadd.f32 0.0, %v253
    %v255 = vpop.f32.mrb[0].mxu0
    %256 = vmatprep.mubr.bf16.mxu0 0
    %257 = vmatmul.mubr.bf16.gmra.mrb[0].mxu0 %v167
    %v258 = vpop.f32.mrb[0].mxu0
    %v259 = vadd.f32 0.0, %v258
    %v260 = vpop.f32.mrb[0].mxu0
    %v261 = vpop.f32.mrb[0].mxu0
    %v262 = vadd.f32 0.0, %v261
    %v263 = vpop.f32.mrb[0].mxu0
    %264 = vmatprep.mubr.bf16.mxu0 0
    %265 = vmatmul.mubr.bf16.gmra.mrb[0].mxu0 %v170
    %v266 = vpop.f32.mrb[0].mxu0
    %v267 = vadd.f32 0.0, %v266
    %v268 = vpop.f32.mrb[0].mxu0
    %v269 = vpop.f32.mrb[0].mxu0
    %v270 = vadd.f32 0.0, %v269
    %v271 = vpop.f32.mrb[0].mxu0
    %272 = vdwg.mxu0
    %v273 = vpack.c.bf16 %v214, %v211
    %v274 = vpack.c.bf16 %v222, %v219
    %v275 = vpack.c.bf16 %v230, %v227
    %v276 = vpack.c.bf16 %v238, %v235
    %v277 = vpack.c.bf16 %v246, %v243
    %v278 = vpack.c.bf16 %v254, %v251
    %v279 = vpack.c.bf16 %v262, %v259
    %v280 = vpack.c.bf16 %v270, %v267
    %v281 = vld [vmem:[%s2] sm:$0x1]
    %v283 = vpack.i.b16 %v281, %v281
    %v285 = vlaneseq
    %v286 = vshrl.u32 %v285, 7
    %v287 = vsub.s32 0, %v286
    %v288 = vrot.slane %v283, %v287
    %v289 = vadd.bf16 %v273, %v288
    %v290 = vadd.bf16 %v274, %v288
    %v291 = vadd.bf16 %v275, %v288
    %v292 = vadd.bf16 %v276, %v288
    %v293 = vadd.bf16 %v277, %v288
    %v294 = vadd.bf16 %v278, %v288
    %v295 = vadd.bf16 %v279, %v288
    %v296 = vadd.bf16 %v280, %v288
    %vm297 = vcmp.ge.bf16.partialorder %v289, 0
    %vm298 = vcmp.ge.bf16.partialorder %v290, 0
    %vm299 = vcmp.ge.bf16.partialorder %v291, 0
    %vm300 = vcmp.ge.bf16.partialorder %v292, 0
    %vm301 = vcmp.ge.bf16.partialorder %v293, 0
    %vm302 = vcmp.ge.bf16.partialorder %v294, 0
    %vm303 = vcmp.ge.bf16.partialorder %v295, 0
    %vm304 = vcmp.ge.bf16.partialorder %v296, 0
    %v305 = vmul.bf16 %v289, 1009007652
    %v306 = vmul.bf16 %v290, 1009007652
    %v307 = vmul.bf16 %v291, 1009007652
    %v308 = vmul.bf16 %v292, 1009007652
    %v309 = vmul.bf16 %v293, 1009007652
    %v310 = vmul.bf16 %v294, 1009007652
    %v311 = vmul.bf16 %v295, 1009007652
    %v312 = vmul.bf16 %v296, 1009007652
    %v313 = vsel %vm297, %v289, %v305
    %v314 = vsel %vm298, %v290, %v306
    %v315 = vsel %vm299, %v291, %v307
    %v316 = vsel %vm300, %v292, %v308
    %v317 = vsel %vm301, %v293, %v309
    %v318 = vsel %vm302, %v294, %v310
    %v319 = vsel %vm303, %v295, %v311
    %v320 = vsel %vm304, %v296, %v312
    %v321 = vld [vmem:[#allocation2] sm:$0xff]
    %v322 = vld [vmem:[#allocation2 + $0x8] sm:$0xff]
    %v323 = vld [vmem:[#allocation2 + $0x10] sm:$0xff]
    %v324 = vld [vmem:[#allocation2 + $0x18] sm:$0xff]
    %v325 = vld [vmem:[#allocation2 + $0x20] sm:$0xff]
    %v326 = vld [vmem:[#allocation2 + $0x28] sm:$0xff]
    %v327 = vld [vmem:[#allocation2 + $0x30] sm:$0xff]
    %v328 = vld [vmem:[#allocation2 + $0x38] sm:$0xff]
    %v329 = vld [vmem:[#allocation2 + $0x40] sm:$0xff]
    %v330 = vld [vmem:[#allocation2 + $0x48] sm:$0xff]
    %v331 = vld [vmem:[#allocation2 + $0x50] sm:$0xff]
    %v332 = vld [vmem:[#allocation2 + $0x58] sm:$0xff]
    %v333 = vld [vmem:[#allocation2 + $0x60] sm:$0xff]
    %v334 = vld [vmem:[#allocation2 + $0x68] sm:$0xff]
    %v335 = vld [vmem:[#allocation2 + $0x70] sm:$0xff]
    %v336 = vld [vmem:[#allocation2 + $0x78] sm:$0xff]
    %v353 = vunpack.c.l.b16 %v321
    %v354 = vunpack.c.h.b16 %v321
    %v355 = vunpack.c.l.b16 %v322
    %v356 = vunpack.c.h.b16 %v322
    %v357 = vunpack.c.l.b16 %v323
    %v358 = vunpack.c.h.b16 %v323
    %v359 = vunpack.c.l.b16 %v324
    %v360 = vunpack.c.h.b16 %v324
    %v361 = vunpack.c.l.b16 %v325
    %v362 = vunpack.c.h.b16 %v325
    %v363 = vunpack.c.l.b16 %v326
    %v364 = vunpack.c.h.b16 %v326
    %v365 = vunpack.c.l.b16 %v327
    %v366 = vunpack.c.h.b16 %v327
    %v367 = vunpack.c.l.b16 %v328
    %v368 = vunpack.c.h.b16 %v328
    %v369 = vunpack.c.l.b16 %v329
    %v370 = vunpack.c.h.b16 %v329
    %v371 = vunpack.c.l.b16 %v330
    %v372 = vunpack.c.h.b16 %v330
    %v373 = vunpack.c.l.b16 %v331
    %v374 = vunpack.c.h.b16 %v331
    %v375 = vunpack.c.l.b16 %v332
    %v376 = vunpack.c.h.b16 %v332
    %v377 = vunpack.c.l.b16 %v333
    %v378 = vunpack.c.h.b16 %v333
    %v379 = vunpack.c.l.b16 %v334
    %v380 = vunpack.c.h.b16 %v334
    %v381 = vunpack.c.l.b16 %v335
    %v382 = vunpack.c.h.b16 %v335
    %v383 = vunpack.c.l.b16 %v336
    %v384 = vunpack.c.h.b16 %v336
    %v385 = vpack.c.b16 %v355, %v353
    %v386 = vpack.c.b16 %v356, %v354
    %v387 = vpack.c.b16 %v359, %v357
    %v388 = vpack.c.b16 %v360, %v358
    %v389 = vpack.c.b16 %v363, %v361
    %v390 = vpack.c.b16 %v364, %v362
    %v391 = vpack.c.b16 %v367, %v365
    %v392 = vpack.c.b16 %v368, %v366
    %v393 = vpack.c.b16 %v371, %v369
    %v394 = vpack.c.b16 %v372, %v370
    %v395 = vpack.c.b16 %v375, %v373
    %v396 = vpack.c.b16 %v376, %v374
    %v397 = vpack.c.b16 %v379, %v377
    %v398 = vpack.c.b16 %v380, %v378
    %v399 = vpack.c.b16 %v383, %v381
    %v400 = vpack.c.b16 %v384, %v382
    %417 = vmatprep.subr.bf16.mxu0 %v386
    %418 = vmatpush1.bf16.msra.mxu0 %v385
    %419 = vmatprep.subr.bf16.mxu0 %v388
    %420 = vmatpush1.bf16.msra.mxu0 %v387
    %421 = vmatprep.subr.bf16.mxu0 %v390
    %422 = vmatpush1.bf16.msra.mxu0 %v389
    %423 = vmatprep.subr.bf16.mxu0 %v392
    %424 = vmatpush1.bf16.msra.mxu0 %v391
    %425 = vmatprep.subr.bf16.mxu0 %v394
    %426 = vmatpush1.bf16.msra.mxu0 %v393
    %427 = vmatprep.subr.bf16.mxu0 %v396
    %428 = vmatpush1.bf16.msra.mxu0 %v395
    %429 = vmatprep.subr.bf16.mxu0 %v398
    %430 = vmatpush1.bf16.msra.mxu0 %v397
    %431 = vmatprep.subr.bf16.mxu0 %v400
    %432 = vmatpush1.bf16.msra.mxu0 %v399
    %433 = vmatprep.subr.bf16.mxu0 0
    %434 = vmatpush1.bf16.msra.mxu0 0
    %435 = vmatprep.subr.bf16.mxu0 0
    %436 = vmatpush1.bf16.msra.mxu0 0
    %437 = vmatprep.subr.bf16.mxu0 0
    %438 = vmatpush1.bf16.msra.mxu0 0
    %439 = vmatprep.subr.bf16.mxu0 0
    %440 = vmatpush1.bf16.msra.mxu0 0
    %441 = vmatprep.subr.bf16.mxu0 0
    %442 = vmatpush1.bf16.msra.mxu0 0
    %443 = vmatprep.subr.bf16.mxu0 0
    %444 = vmatpush1.bf16.msra.mxu0 0
    %445 = vmatprep.subr.bf16.mxu0 0
    %446 = vmatpush1.bf16.msra.mxu0 0
    %447 = vmatprep.subr.bf16.mxu0 0
    %448 = vmatpush1.bf16.msra.mxu0 0
    %449 = vmatprep.mubr.bf16.mxu0 0
    %450 = vmatmul.mubr.bf16.gmra.mrb[0].mxu0 %v313
    %v451 = vpop.f32.mrb[0].mxu0
    %v452 = vadd.f32 0.0, %v451
    %v453 = vpop.f32.mrb[0].mxu0
    %v454 = vadd.f32 0.0, %v453
    %v455 = vpop.f32.mrb[0].mxu0
    %v456 = vadd.f32 0.0, %v455
    %v457 = vpop.f32.mrb[0].mxu0
    %v458 = vadd.f32 0.0, %v457
    %459 = vmatprep.mubr.bf16.mxu0 0
    %460 = vmatmul.mubr.bf16.gmra.mrb[0].mxu0 %v314
    %v461 = vpop.f32.mrb[0].mxu0
    %v462 = vadd.f32 0.0, %v461
    %v463 = vpop.f32.mrb[0].mxu0
    %v464 = vadd.f32 0.0, %v463
    %v465 = vpop.f32.mrb[0].mxu0
    %v466 = vadd.f32 0.0, %v465
    %v467 = vpop.f32.mrb[0].mxu0
    %v468 = vadd.f32 0.0, %v467
    %469 = vmatprep.mubr.bf16.mxu0 0
    %470 = vmatmul.mubr.bf16.gmra.mrb[0].mxu0 %v315
    %v471 = vpop.f32.mrb[0].mxu0
    %v472 = vadd.f32 0.0, %v471
    %v473 = vpop.f32.mrb[0].mxu0
    %v474 = vadd.f32 0.0, %v473
    %v475 = vpop.f32.mrb[0].mxu0
    %v476 = vadd.f32 0.0, %v475
    %v477 = vpop.f32.mrb[0].mxu0
    %v478 = vadd.f32 0.0, %v477
    %479 = vmatprep.mubr.bf16.mxu0 0
    %480 = vmatmul.mubr.bf16.gmra.mrb[0].mxu0 %v316
    %v481 = vpop.f32.mrb[0].mxu0
    %v482 = vadd.f32 0.0, %v481
    %v483 = vpop.f32.mrb[0].mxu0
    %v484 = vadd.f32 0.0, %v483
    %v485 = vpop.f32.mrb[0].mxu0
    %v486 = vadd.f32 0.0, %v485
    %v487 = vpop.f32.mrb[0].mxu0
    %v488 = vadd.f32 0.0, %v487
    %489 = vmatprep.mubr.bf16.mxu0 0
    %490 = vmatmul.mubr.bf16.gmra.mrb[0].mxu0 %v317
    %v491 = vpop.f32.mrb[0].mxu0
    %v492 = vadd.f32 0.0, %v491
    %v493 = vpop.f32.mrb[0].mxu0
    %v494 = vadd.f32 0.0, %v493
    %v495 = vpop.f32.mrb[0].mxu0
    %v496 = vadd.f32 0.0, %v495
    %v497 = vpop.f32.mrb[0].mxu0
    %v498 = vadd.f32 0.0, %v497
    %499 = vmatprep.mubr.bf16.mxu0 0
    %500 = vmatmul.mubr.bf16.gmra.mrb[0].mxu0 %v318
    %v501 = vpop.f32.mrb[0].mxu0
    %v502 = vadd.f32 0.0, %v501
    %v503 = vpop.f32.mrb[0].mxu0
    %v504 = vadd.f32 0.0, %v503
    %v505 = vpop.f32.mrb[0].mxu0
    %v506 = vadd.f32 0.0, %v505
    %v507 = vpop.f32.mrb[0].mxu0
    %v508 = vadd.f32 0.0, %v507
    %509 = vmatprep.mubr.bf16.mxu0 0
    %510 = vmatmul.mubr.bf16.gmra.mrb[0].mxu0 %v319
    %v511 = vpop.f32.mrb[0].mxu0
    %v512 = vadd.f32 0.0, %v511
    %v513 = vpop.f32.mrb[0].mxu0
    %v514 = vadd.f32 0.0, %v513
    %v515 = vpop.f32.mrb[0].mxu0
    %v516 = vadd.f32 0.0, %v515
    %v517 = vpop.f32.mrb[0].mxu0
    %v518 = vadd.f32 0.0, %v517
    %519 = vmatprep.mubr.bf16.mxu0 0
    %520 = vmatmul.mubr.bf16.gmra.mrb[0].mxu0 %v320
    %v521 = vpop.f32.mrb[0].mxu0
    %v522 = vadd.f32 0.0, %v521
    %v523 = vpop.f32.mrb[0].mxu0
    %v524 = vadd.f32 0.0, %v523
    %v525 = vpop.f32.mrb[0].mxu0
    %v526 = vadd.f32 0.0, %v525
    %v527 = vpop.f32.mrb[0].mxu0
    %v528 = vadd.f32 0.0, %v527
    %529 = vdwg.mxu0
    %v530 = vpack.c.bf16 %v456, %v452
    %v531 = vpack.c.bf16 %v458, %v454
    %v532 = vpack.c.bf16 %v466, %v462
    %v533 = vpack.c.bf16 %v468, %v464
    %v534 = vpack.c.bf16 %v476, %v472
    %v535 = vpack.c.bf16 %v478, %v474
    %v536 = vpack.c.bf16 %v486, %v482
    %v537 = vpack.c.bf16 %v488, %v484
    %v538 = vpack.c.bf16 %v496, %v492
    %v539 = vpack.c.bf16 %v498, %v494
    %v540 = vpack.c.bf16 %v506, %v502
    %v541 = vpack.c.bf16 %v508, %v504
    %v542 = vpack.c.bf16 %v516, %v512
    %v543 = vpack.c.bf16 %v518, %v514
    %v544 = vpack.c.bf16 %v526, %v522
    %v545 = vpack.c.bf16 %v528, %v524
    %v546 = vld [vmem:[%s4] sm:$0x3]
    %v549 = vunpack.c.l.s4 1966171168
    %v550 = vunpack.c.0.s8 %v549
    %v551 = vlaneseq
    %v552 = vshrl.u32 %v551, 7
    %v553 = vsub.s32 %v550, %v552
    %v554 = vrot.slane %v546, %v553
    %v555 = vcombine.high %v554, %v554
    %v557 = vunpack.c.l.s4 1966171168
    %v558 = vunpack.c.0.s8 %v557
    %v559 = vlaneseq
    %v560 = vshrl.u32 %v559, 7
    %v561 = vsub.s32 %v558, %v560
    %v562 = vrot.slane %v554, %v561
    %v564 = vunpack.c.l.s4 1966171168
    %v565 = vunpack.c.0.s8 %v564
    %v566 = vlaneseq
    %v567 = vshrl.u32 %v566, 7
    %v568 = vsub.s32 %v565, %v567
    %v569 = vrot.slane %v555, %v568
    %v571 = vpack.i.b16 %v562, %v562
    %v573 = vlaneseq
    %v574 = vshrl.u32 %v573, 7
    %v575 = vsub.s32 0, %v574
    %v576 = vrot.slane %v571, %v575
    %v578 = vpack.i.b16 %v569, %v569
    %v580 = vlaneseq
    %v581 = vshrl.u32 %v580, 7
    %v582 = vsub.s32 0, %v581
    %v583 = vrot.slane %v578, %v582
    %v584 = vadd.bf16 %v530, %v576
    %v585 = vadd.bf16 %v531, %v583
    %v586 = vadd.bf16 %v532, %v576
    %v587 = vadd.bf16 %v533, %v583
    %v588 = vadd.bf16 %v534, %v576
    %v589 = vadd.bf16 %v535, %v583
    %v590 = vadd.bf16 %v536, %v576
    %v591 = vadd.bf16 %v537, %v583
    %v592 = vadd.bf16 %v538, %v576
    %v593 = vadd.bf16 %v539, %v583
    %v594 = vadd.bf16 %v540, %v576
    %v595 = vadd.bf16 %v541, %v583
    %v596 = vadd.bf16 %v542, %v576
    %v597 = vadd.bf16 %v543, %v583
    %v598 = vadd.bf16 %v544, %v576
    %v599 = vadd.bf16 %v545, %v583
    %vm600 = vcmp.ge.bf16.partialorder %v584, 0
    %vm601 = vcmp.ge.bf16.partialorder %v585, 0
    %vm602 = vcmp.ge.bf16.partialorder %v586, 0
    %vm603 = vcmp.ge.bf16.partialorder %v587, 0
    %vm604 = vcmp.ge.bf16.partialorder %v588, 0
    %vm605 = vcmp.ge.bf16.partialorder %v589, 0
    %vm606 = vcmp.ge.bf16.partialorder %v590, 0
    %vm607 = vcmp.ge.bf16.partialorder %v591, 0
    %vm608 = vcmp.ge.bf16.partialorder %v592, 0
    %vm609 = vcmp.ge.bf16.partialorder %v593, 0
    %vm610 = vcmp.ge.bf16.partialorder %v594, 0
    %vm611 = vcmp.ge.bf16.partialorder %v595, 0
    %vm612 = vcmp.ge.bf16.partialorder %v596, 0
    %vm613 = vcmp.ge.bf16.partialorder %v597, 0
    %vm614 = vcmp.ge.bf16.partialorder %v598, 0
    %vm615 = vcmp.ge.bf16.partialorder %v599, 0
    %v616 = vmul.bf16 %v584, 1009007652
    %v617 = vmul.bf16 %v585, 1009007652
    %v618 = vmul.bf16 %v586, 1009007652
    %v619 = vmul.bf16 %v587, 1009007652
    %v620 = vmul.bf16 %v588, 1009007652
    %v621 = vmul.bf16 %v589, 1009007652
    %v622 = vmul.bf16 %v590, 1009007652
    %v623 = vmul.bf16 %v591, 1009007652
    %v624 = vmul.bf16 %v592, 1009007652
    %v625 = vmul.bf16 %v593, 1009007652
    %v626 = vmul.bf16 %v594, 1009007652
    %v627 = vmul.bf16 %v595, 1009007652
    %v628 = vmul.bf16 %v596, 1009007652
    %v629 = vmul.bf16 %v597, 1009007652
    %v630 = vmul.bf16 %v598, 1009007652
    %v631 = vmul.bf16 %v599, 1009007652
    %v632 = vsel %vm600, %v584, %v616
    %v633 = vsel %vm601, %v585, %v617
    %v634 = vsel %vm602, %v586, %v618
    %v635 = vsel %vm603, %v587, %v619
    %v636 = vsel %vm604, %v588, %v620
    %v637 = vsel %vm605, %v589, %v621
    %v638 = vsel %vm606, %v590, %v622
    %v639 = vsel %vm607, %v591, %v623
    %v640 = vsel %vm608, %v592, %v624
    %v641 = vsel %vm609, %v593, %v625
    %v642 = vsel %vm610, %v594, %v626
    %v643 = vsel %vm611, %v595, %v627
    %v644 = vsel %vm612, %v596, %v628
    %v645 = vsel %vm613, %v597, %v629
    %v646 = vsel %vm614, %v598, %v630
    %v647 = vsel %vm615, %v599, %v631
    %v648 = vld [vmem:[#allocation5] sm:$0xff]
    %v649 = vld [vmem:[#allocation5 + $0x8] sm:$0xff]
    %v650 = vld [vmem:[#allocation5 + $0x10] sm:$0xff]
    %v651 = vld [vmem:[#allocation5 + $0x18] sm:$0xff]
    %v652 = vld [vmem:[#allocation5 + $0x20] sm:$0xff]
    %v653 = vld [vmem:[#allocation5 + $0x28] sm:$0xff]
    %v654 = vld [vmem:[#allocation5 + $0x30] sm:$0xff]
    %v655 = vld [vmem:[#allocation5 + $0x38] sm:$0xff]
    %v656 = vld [vmem:[#allocation5 + $0x40] sm:$0xff]
    %v657 = vld [vmem:[#allocation5 + $0x48] sm:$0xff]
    %v658 = vld [vmem:[#allocation5 + $0x50] sm:$0xff]
    %v659 = vld [vmem:[#allocation5 + $0x58] sm:$0xff]
    %v660 = vld [vmem:[#allocation5 + $0x60] sm:$0xff]
    %v661 = vld [vmem:[#allocation5 + $0x68] sm:$0xff]
    %v662 = vld [vmem:[#allocation5 + $0x70] sm:$0xff]
    %v663 = vld [vmem:[#allocation5 + $0x78] sm:$0xff]
    %v664 = vld [vmem:[#allocation5 + $0x80] sm:$0xff]
    %v665 = vld [vmem:[#allocation5 + $0x88] sm:$0xff]
    %v666 = vld [vmem:[#allocation5 + $0x90] sm:$0xff]
    %v667 = vld [vmem:[#allocation5 + $0x98] sm:$0xff]
    %v668 = vld [vmem:[#allocation5 + $0xa0] sm:$0xff]
    %v669 = vld [vmem:[#allocation5 + $0xa8] sm:$0xff]
    %v670 = vld [vmem:[#allocation5 + $0xb0] sm:$0xff]
    %v671 = vld [vmem:[#allocation5 + $0xb8] sm:$0xff]
    %v672 = vld [vmem:[#allocation5 + $0xc0] sm:$0xff]
    %v673 = vld [vmem:[#allocation5 + $0xc8] sm:$0xff]
    %v674 = vld [vmem:[#allocation5 + $0xd0] sm:$0xff]
    %v675 = vld [vmem:[#allocation5 + $0xd8] sm:$0xff]
    %v676 = vld [vmem:[#allocation5 + $0xe0] sm:$0xff]
    %v677 = vld [vmem:[#allocation5 + $0xe8] sm:$0xff]
    %v678 = vld [vmem:[#allocation5 + $0xf0] sm:$0xff]
    %v679 = vld [vmem:[#allocation5 + $0xf8] sm:$0xff]
    %v680 = vld [vmem:[#allocation5 + $0x100] sm:$0xff]
    %v681 = vld [vmem:[#allocation5 + $0x108] sm:$0xff]
    %v682 = vld [vmem:[#allocation5 + $0x110] sm:$0xff]
    %v683 = vld [vmem:[#allocation5 + $0x118] sm:$0xff]
    %v684 = vld [vmem:[#allocation5 + $0x120] sm:$0xff]
    %v685 = vld [vmem:[#allocation5 + $0x128] sm:$0xff]
    %v686 = vld [vmem:[#allocation5 + $0x130] sm:$0xff]
    %v687 = vld [vmem:[#allocation5 + $0x138] sm:$0xff]
    %v688 = vld [vmem:[#allocation5 + $0x140] sm:$0xff]
    %v689 = vld [vmem:[#allocation5 + $0x148] sm:$0xff]
    %v690 = vld [vmem:[#allocation5 + $0x150] sm:$0xff]
    %v691 = vld [vmem:[#allocation5 + $0x158] sm:$0xff]
    %v692 = vld [vmem:[#allocation5 + $0x160] sm:$0xff]
    %v693 = vld [vmem:[#allocation5 + $0x168] sm:$0xff]
    %v694 = vld [vmem:[#allocation5 + $0x170] sm:$0xff]
    %v695 = vld [vmem:[#allocation5 + $0x178] sm:$0xff]
    %v696 = vld [vmem:[#allocation5 + $0x180] sm:$0xff]
    %v697 = vld [vmem:[#allocation5 + $0x188] sm:$0xff]
    %v698 = vld [vmem:[#allocation5 + $0x190] sm:$0xff]
    %v699 = vld [vmem:[#allocation5 + $0x198] sm:$0xff]
    %v700 = vld [vmem:[#allocation5 + $0x1a0] sm:$0xff]
    %v701 = vld [vmem:[#allocation5 + $0x1a8] sm:$0xff]
    %v702 = vld [vmem:[#allocation5 + $0x1b0] sm:$0xff]
    %v703 = vld [vmem:[#allocation5 + $0x1b8] sm:$0xff]
    %v704 = vld [vmem:[#allocation5 + $0x1c0] sm:$0xff]
    %v705 = vld [vmem:[#allocation5 + $0x1c8] sm:$0xff]
    %v706 = vld [vmem:[#allocation5 + $0x1d0] sm:$0xff]
    %v707 = vld [vmem:[#allocation5 + $0x1d8] sm:$0xff]
    %v708 = vld [vmem:[#allocation5 + $0x1e0] sm:$0xff]
    %v709 = vld [vmem:[#allocation5 + $0x1e8] sm:$0xff]
    %v710 = vld [vmem:[#allocation5 + $0x1f0] sm:$0xff]
    %v711 = vld [vmem:[#allocation5 + $0x1f8] sm:$0xff]
    %v776 = vunpack.c.l.b16 %v648
    %v777 = vunpack.c.h.b16 %v648
    %v778 = vunpack.c.l.b16 %v649
    %v779 = vunpack.c.h.b16 %v649
    %v780 = vunpack.c.l.b16 %v650
    %v781 = vunpack.c.h.b16 %v650
    %v782 = vunpack.c.l.b16 %v651
    %v783 = vunpack.c.h.b16 %v651
    %v784 = vunpack.c.l.b16 %v652
    %v785 = vunpack.c.h.b16 %v652
    %v786 = vunpack.c.l.b16 %v653
    %v787 = vunpack.c.h.b16 %v653
    %v788 = vunpack.c.l.b16 %v654
    %v789 = vunpack.c.h.b16 %v654
    %v790 = vunpack.c.l.b16 %v655
    %v791 = vunpack.c.h.b16 %v655
    %v792 = vunpack.c.l.b16 %v656
    %v793 = vunpack.c.h.b16 %v656
    %v794 = vunpack.c.l.b16 %v657
    %v795 = vunpack.c.h.b16 %v657
    %v796 = vunpack.c.l.b16 %v658
    %v797 = vunpack.c.h.b16 %v658
    %v798 = vunpack.c.l.b16 %v659
    %v799 = vunpack.c.h.b16 %v659
    %v800 = vunpack.c.l.b16 %v660
    %v801 = vunpack.c.h.b16 %v660
    %v802 = vunpack.c.l.b16 %v661
    %v803 = vunpack.c.h.b16 %v661
    %v804 = vunpack.c.l.b16 %v662
    %v805 = vunpack.c.h.b16 %v662
    %v806 = vunpack.c.l.b16 %v663
    %v807 = vunpack.c.h.b16 %v663
    %v808 = vunpack.c.l.b16 %v664
    %v809 = vunpack.c.h.b16 %v664
    %v810 = vunpack.c.l.b16 %v665
    %v811 = vunpack.c.h.b16 %v665
    %v812 = vunpack.c.l.b16 %v666
    %v813 = vunpack.c.h.b16 %v666
    %v814 = vunpack.c.l.b16 %v667
    %v815 = vunpack.c.h.b16 %v667
    %v816 = vunpack.c.l.b16 %v668
    %v817 = vunpack.c.h.b16 %v668
    %v818 = vunpack.c.l.b16 %v669
    %v819 = vunpack.c.h.b16 %v669
    %v820 = vunpack.c.l.b16 %v670
    %v821 = vunpack.c.h.b16 %v670
    %v822 = vunpack.c.l.b16 %v671
    %v823 = vunpack.c.h.b16 %v671
    %v824 = vunpack.c.l.b16 %v672
    %v825 = vunpack.c.h.b16 %v672
    %v826 = vunpack.c.l.b16 %v673
    %v827 = vunpack.c.h.b16 %v673
    %v828 = vunpack.c.l.b16 %v674
    %v829 = vunpack.c.h.b16 %v674
    %v830 = vunpack.c.l.b16 %v675
    %v831 = vunpack.c.h.b16 %v675
    %v832 = vunpack.c.l.b16 %v676
    %v833 = vunpack.c.h.b16 %v676
    %v834 = vunpack.c.l.b16 %v677
    %v835 = vunpack.c.h.b16 %v677
    %v836 = vunpack.c.l.b16 %v678
    %v837 = vunpack.c.h.b16 %v678
    %v838 = vunpack.c.l.b16 %v679
    %v839 = vunpack.c.h.b16 %v679
    %v840 = vunpack.c.l.b16 %v680
    %v841 = vunpack.c.h.b16 %v680
    %v842 = vunpack.c.l.b16 %v681
    %v843 = vunpack.c.h.b16 %v681
    %v844 = vunpack.c.l.b16 %v682
    %v845 = vunpack.c.h.b16 %v682
    %v846 = vunpack.c.l.b16 %v683
    %v847 = vunpack.c.h.b16 %v683
    %v848 = vunpack.c.l.b16 %v684
    %v849 = vunpack.c.h.b16 %v684
    %v850 = vunpack.c.l.b16 %v685
    %v851 = vunpack.c.h.b16 %v685
    %v852 = vunpack.c.l.b16 %v686
    %v853 = vunpack.c.h.b16 %v686
    %v854 = vunpack.c.l.b16 %v687
    %v855 = vunpack.c.h.b16 %v687
    %v856 = vunpack.c.l.b16 %v688
    %v857 = vunpack.c.h.b16 %v688
    %v858 = vunpack.c.l.b16 %v689
    %v859 = vunpack.c.h.b16 %v689
    %v860 = vunpack.c.l.b16 %v690
    %v861 = vunpack.c.h.b16 %v690
    %v862 = vunpack.c.l.b16 %v691
    %v863 = vunpack.c.h.b16 %v691
    %v864 = vunpack.c.l.b16 %v692
    %v865 = vunpack.c.h.b16 %v692
    %v866 = vunpack.c.l.b16 %v693
    %v867 = vunpack.c.h.b16 %v693
    %v868 = vunpack.c.l.b16 %v694
    %v869 = vunpack.c.h.b16 %v694
    %v870 = vunpack.c.l.b16 %v695
    %v871 = vunpack.c.h.b16 %v695
    %v872 = vunpack.c.l.b16 %v696
    %v873 = vunpack.c.h.b16 %v696
    %v874 = vunpack.c.l.b16 %v697
    %v875 = vunpack.c.h.b16 %v697
    %v876 = vunpack.c.l.b16 %v698
    %v877 = vunpack.c.h.b16 %v698
    %v878 = vunpack.c.l.b16 %v699
    %v879 = vunpack.c.h.b16 %v699
    %v880 = vunpack.c.l.b16 %v700
    %v881 = vunpack.c.h.b16 %v700
    %v882 = vunpack.c.l.b16 %v701
    %v883 = vunpack.c.h.b16 %v701
    %v884 = vunpack.c.l.b16 %v702
    %v885 = vunpack.c.h.b16 %v702
    %v886 = vunpack.c.l.b16 %v703
    %v887 = vunpack.c.h.b16 %v703
    %v888 = vunpack.c.l.b16 %v704
    %v889 = vunpack.c.h.b16 %v704
    %v890 = vunpack.c.l.b16 %v705
    %v891 = vunpack.c.h.b16 %v705
    %v892 = vunpack.c.l.b16 %v706
    %v893 = vunpack.c.h.b16 %v706
    %v894 = vunpack.c.l.b16 %v707
    %v895 = vunpack.c.h.b16 %v707
    %v896 = vunpack.c.l.b16 %v708
    %v897 = vunpack.c.h.b16 %v708
    %v898 = vunpack.c.l.b16 %v709
    %v899 = vunpack.c.h.b16 %v709
    %v900 = vunpack.c.l.b16 %v710
    %v901 = vunpack.c.h.b16 %v710
    %v902 = vunpack.c.l.b16 %v711
    %v903 = vunpack.c.h.b16 %v711
    %v904 = vpack.c.b16 %v780, %v776
    %v905 = vpack.c.b16 %v781, %v777
    %v906 = vpack.c.b16 %v782, %v778
    %v907 = vpack.c.b16 %v783, %v779
    %v908 = vpack.c.b16 %v788, %v784
    %v909 = vpack.c.b16 %v789, %v785
    %v910 = vpack.c.b16 %v790, %v786
    %v911 = vpack.c.b16 %v791, %v787
    %v912 = vpack.c.b16 %v796, %v792
    %v913 = vpack.c.b16 %v797, %v793
    %v914 = vpack.c.b16 %v798, %v794
    %v915 = vpack.c.b16 %v799, %v795
    %v916 = vpack.c.b16 %v804, %v800
    %v917 = vpack.c.b16 %v805, %v801
    %v918 = vpack.c.b16 %v806, %v802
    %v919 = vpack.c.b16 %v807, %v803
    %v920 = vpack.c.b16 %v812, %v808
    %v921 = vpack.c.b16 %v813, %v809
    %v922 = vpack.c.b16 %v814, %v810
    %v923 = vpack.c.b16 %v815, %v811
    %v924 = vpack.c.b16 %v820, %v816
    %v925 = vpack.c.b16 %v821, %v817
    %v926 = vpack.c.b16 %v822, %v818
    %v927 = vpack.c.b16 %v823, %v819
    %v928 = vpack.c.b16 %v828, %v824
    %v929 = vpack.c.b16 %v829, %v825
    %v930 = vpack.c.b16 %v830, %v826
    %v931 = vpack.c.b16 %v831, %v827
    %v932 = vpack.c.b16 %v836, %v832
    %v933 = vpack.c.b16 %v837, %v833
    %v934 = vpack.c.b16 %v838, %v834
    %v935 = vpack.c.b16 %v839, %v835
    %v936 = vpack.c.b16 %v844, %v840
    %v937 = vpack.c.b16 %v845, %v841
    %v938 = vpack.c.b16 %v846, %v842
    %v939 = vpack.c.b16 %v847, %v843
    %v940 = vpack.c.b16 %v852, %v848
    %v941 = vpack.c.b16 %v853, %v849
    %v942 = vpack.c.b16 %v854, %v850
    %v943 = vpack.c.b16 %v855, %v851
    %v944 = vpack.c.b16 %v860, %v856
    %v945 = vpack.c.b16 %v861, %v857
    %v946 = vpack.c.b16 %v862, %v858
    %v947 = vpack.c.b16 %v863, %v859
    %v948 = vpack.c.b16 %v868, %v864
    %v949 = vpack.c.b16 %v869, %v865
    %v950 = vpack.c.b16 %v870, %v866
    %v951 = vpack.c.b16 %v871, %v867
    %v952 = vpack.c.b16 %v876, %v872
    %v953 = vpack.c.b16 %v877, %v873
    %v954 = vpack.c.b16 %v878, %v874
    %v955 = vpack.c.b16 %v879, %v875
    %v956 = vpack.c.b16 %v884, %v880
    %v957 = vpack.c.b16 %v885, %v881
    %v958 = vpack.c.b16 %v886, %v882
    %v959 = vpack.c.b16 %v887, %v883
    %v960 = vpack.c.b16 %v892, %v888
    %v961 = vpack.c.b16 %v893, %v889
    %v962 = vpack.c.b16 %v894, %v890
    %v963 = vpack.c.b16 %v895, %v891
    %v964 = vpack.c.b16 %v900, %v896
    %v965 = vpack.c.b16 %v901, %v897
    %v966 = vpack.c.b16 %v902, %v898
    %v967 = vpack.c.b16 %v903, %v899
    %1032 = vmatprep.subr.bf16.mxu0 %v905
    %1033 = vmatpush1.bf16.msra.mxu0 %v904
    %1034 = vmatprep.subr.bf16.mxu0 %v909
    %1035 = vmatpush1.bf16.msra.mxu0 %v908
    %1036 = vmatprep.subr.bf16.mxu0 %v913
    %1037 = vmatpush1.bf16.msra.mxu0 %v912
    %1038 = vmatprep.subr.bf16.mxu0 %v917
    %1039 = vmatpush1.bf16.msra.mxu0 %v916
    %1040 = vmatprep.subr.bf16.mxu0 %v921
    %1041 = vmatpush1.bf16.msra.mxu0 %v920
    %1042 = vmatprep.subr.bf16.mxu0 %v925
    %1043 = vmatpush1.bf16.msra.mxu0 %v924
    %1044 = vmatprep.subr.bf16.mxu0 %v929
    %1045 = vmatpush1.bf16.msra.mxu0 %v928
    %1046 = vmatprep.subr.bf16.mxu0 %v933
    %1047 = vmatpush1.bf16.msra.mxu0 %v932
    %1048 = vmatprep.subr.bf16.mxu0 %v937
    %1049 = vmatpush1.bf16.msra.mxu0 %v936
    %1050 = vmatprep.subr.bf16.mxu0 %v941
    %1051 = vmatpush1.bf16.msra.mxu0 %v940
    %1052 = vmatprep.subr.bf16.mxu0 %v945
    %1053 = vmatpush1.bf16.msra.mxu0 %v944
    %1054 = vmatprep.subr.bf16.mxu0 %v949
    %1055 = vmatpush1.bf16.msra.mxu0 %v948
    %1056 = vmatprep.subr.bf16.mxu0 %v953
    %1057 = vmatpush1.bf16.msra.mxu0 %v952
    %1058 = vmatprep.subr.bf16.mxu0 %v957
    %1059 = vmatpush1.bf16.msra.mxu0 %v956
    %1060 = vmatprep.subr.bf16.mxu0 %v961
    %1061 = vmatpush1.bf16.msra.mxu0 %v960
    %1062 = vmatprep.subr.bf16.mxu0 %v965
    %1063 = vmatpush1.bf16.msra.mxu0 %v964
    %1064 = vmatprep.mubr.bf16.mxu0 %v633
    %1065 = vmatmul.mubr.bf16.gmra.mrb[0].mxu0 %v632
    %v1066 = vpop.f32.mrb[0].mxu0
    %v1067 = vadd.f32 0.0, %v1066
    %v1068 = vpop.f32.mrb[0].mxu0
    %v1069 = vadd.f32 0.0, %v1068
    %v1070 = vpop.f32.mrb[0].mxu0
    %v1071 = vadd.f32 0.0, %v1070
    %v1072 = vpop.f32.mrb[0].mxu0
    %v1073 = vadd.f32 0.0, %v1072
    %1074 = vmatprep.mubr.bf16.mxu0 %v635
    %1075 = vmatmul.mubr.bf16.gmra.mrb[0].mxu0 %v634
    %v1076 = vpop.f32.mrb[0].mxu0
    %v1077 = vadd.f32 0.0, %v1076
    %v1078 = vpop.f32.mrb[0].mxu0
    %v1079 = vadd.f32 0.0, %v1078
    %v1080 = vpop.f32.mrb[0].mxu0
    %v1081 = vadd.f32 0.0, %v1080
    %v1082 = vpop.f32.mrb[0].mxu0
    %v1083 = vadd.f32 0.0, %v1082
    %1084 = vmatprep.mubr.bf16.mxu0 %v637
    %1085 = vmatmul.mubr.bf16.gmra.mrb[0].mxu0 %v636
    %v1086 = vpop.f32.mrb[0].mxu0
    %v1087 = vadd.f32 0.0, %v1086
    %v1088 = vpop.f32.mrb[0].mxu0
    %v1089 = vadd.f32 0.0, %v1088
    %v1090 = vpop.f32.mrb[0].mxu0
    %v1091 = vadd.f32 0.0, %v1090
    %v1092 = vpop.f32.mrb[0].mxu0
    %v1093 = vadd.f32 0.0, %v1092
    %1094 = vmatprep.mubr.bf16.mxu0 %v639
    %1095 = vmatmul.mubr.bf16.gmra.mrb[0].mxu0 %v638
    %v1096 = vpop.f32.mrb[0].mxu0
    %v1097 = vadd.f32 0.0, %v1096
    %v1098 = vpop.f32.mrb[0].mxu0
    %v1099 = vadd.f32 0.0, %v1098
    %v1100 = vpop.f32.mrb[0].mxu0
    %v1101 = vadd.f32 0.0, %v1100
    %v1102 = vpop.f32.mrb[0].mxu0
    %v1103 = vadd.f32 0.0, %v1102
    %1104 = vmatprep.mubr.bf16.mxu0 %v641
    %1105 = vmatmul.mubr.bf16.gmra.mrb[0].mxu0 %v640
    %v1106 = vpop.f32.mrb[0].mxu0
    %v1107 = vadd.f32 0.0, %v1106
    %v1108 = vpop.f32.mrb[0].mxu0
    %v1109 = vadd.f32 0.0, %v1108
    %v1110 = vpop.f32.mrb[0].mxu0
    %v1111 = vadd.f32 0.0, %v1110
    %v1112 = vpop.f32.mrb[0].mxu0
    %v1113 = vadd.f32 0.0, %v1112
    %1114 = vmatprep.mubr.bf16.mxu0 %v643
    %1115 = vmatmul.mubr.bf16.gmra.mrb[0].mxu0 %v642
    %v1116 = vpop.f32.mrb[0].mxu0
    %v1117 = vadd.f32 0.0, %v1116
    %v1118 = vpop.f32.mrb[0].mxu0
    %v1119 = vadd.f32 0.0, %v1118
    %v1120 = vpop.f32.mrb[0].mxu0
    %v1121 = vadd.f32 0.0, %v1120
    %v1122 = vpop.f32.mrb[0].mxu0
    %v1123 = vadd.f32 0.0, %v1122
    %1124 = vmatprep.mubr.bf16.mxu0 %v645
    %1125 = vmatmul.mubr.bf16.gmra.mrb[0].mxu0 %v644
    %v1126 = vpop.f32.mrb[0].mxu0
    %v1127 = vadd.f32 0.0, %v1126
    %v1128 = vpop.f32.mrb[0].mxu0
    %v1129 = vadd.f32 0.0, %v1128
    %v1130 = vpop.f32.mrb[0].mxu0
    %v1131 = vadd.f32 0.0, %v1130
    %v1132 = vpop.f32.mrb[0].mxu0
    %v1133 = vadd.f32 0.0, %v1132
    %1134 = vmatprep.mubr.bf16.mxu0 %v647
    %1135 = vmatmul.mubr.bf16.gmra.mrb[0].mxu0 %v646
    %v1136 = vpop.f32.mrb[0].mxu0
    %v1137 = vadd.f32 0.0, %v1136
    %v1138 = vpop.f32.mrb[0].mxu0
    %v1139 = vadd.f32 0.0, %v1138
    %v1140 = vpop.f32.mrb[0].mxu0
    %v1141 = vadd.f32 0.0, %v1140
    %v1142 = vpop.f32.mrb[0].mxu0
    %v1143 = vadd.f32 0.0, %v1142
    %1144 = vdwg.mxu0
    %1145 = vmatprep.subr.bf16.mxu0 %v907
    %1146 = vmatpush1.bf16.msra.mxu0 %v906
    %1147 = vmatprep.subr.bf16.mxu0 %v911
    %1148 = vmatpush1.bf16.msra.mxu0 %v910
    %1149 = vmatprep.subr.bf16.mxu0 %v915
    %1150 = vmatpush1.bf16.msra.mxu0 %v914
    %1151 = vmatprep.subr.bf16.mxu0 %v919
    %1152 = vmatpush1.bf16.msra.mxu0 %v918
    %1153 = vmatprep.subr.bf16.mxu0 %v923
    %1154 = vmatpush1.bf16.msra.mxu0 %v922
    %1155 = vmatprep.subr.bf16.mxu0 %v927
    %1156 = vmatpush1.bf16.msra.mxu0 %v926
    %1157 = vmatprep.subr.bf16.mxu0 %v931
    %1158 = vmatpush1.bf16.msra.mxu0 %v930
    %1159 = vmatprep.subr.bf16.mxu0 %v935
    %1160 = vmatpush1.bf16.msra.mxu0 %v934
    %1161 = vmatprep.subr.bf16.mxu0 %v939
    %1162 = vmatpush1.bf16.msra.mxu0 %v938
    %1163 = vmatprep.subr.bf16.mxu0 %v943
    %1164 = vmatpush1.bf16.msra.mxu0 %v942
    %1165 = vmatprep.subr.bf16.mxu0 %v947
    %1166 = vmatpush1.bf16.msra.mxu0 %v946
    %1167 = vmatprep.subr.bf16.mxu0 %v951
    %1168 = vmatpush1.bf16.msra.mxu0 %v950
    %1169 = vmatprep.subr.bf16.mxu0 %v955
    %1170 = vmatpush1.bf16.msra.mxu0 %v954
    %1171 = vmatprep.subr.bf16.mxu0 %v959
    %1172 = vmatpush1.bf16.msra.mxu0 %v958
    %1173 = vmatprep.subr.bf16.mxu0 %v963
    %1174 = vmatpush1.bf16.msra.mxu0 %v962
    %1175 = vmatprep.subr.bf16.mxu0 %v967
    %1176 = vmatpush1.bf16.msra.mxu0 %v966
    %1177 = vmatprep.mubr.bf16.mxu0 %v633
    %1178 = vmatmul.mubr.bf16.gmra.mrb[0].mxu0 %v632
    %v1179 = vpop.f32.mrb[0].mxu0
    %v1180 = vadd.f32 0.0, %v1179
    %v1181 = vpop.f32.mrb[0].mxu0
    %v1182 = vadd.f32 0.0, %v1181
    %v1183 = vpop.f32.mrb[0].mxu0
    %v1184 = vadd.f32 0.0, %v1183
    %v1185 = vpop.f32.mrb[0].mxu0
    %v1186 = vadd.f32 0.0, %v1185
    %1187 = vmatprep.mubr.bf16.mxu0 %v635
    %1188 = vmatmul.mubr.bf16.gmra.mrb[0].mxu0 %v634
    %v1189 = vpop.f32.mrb[0].mxu0
    %v1190 = vadd.f32 0.0, %v1189
    %v1191 = vpop.f32.mrb[0].mxu0
    %v1192 = vadd.f32 0.0, %v1191
    %v1193 = vpop.f32.mrb[0].mxu0
    %v1194 = vadd.f32 0.0, %v1193
    %v1195 = vpop.f32.mrb[0].mxu0
    %v1196 = vadd.f32 0.0, %v1195
    %1197 = vmatprep.mubr.bf16.mxu0 %v637
    %1198 = vmatmul.mubr.bf16.gmra.mrb[0].mxu0 %v636
    %v1199 = vpop.f32.mrb[0].mxu0
    %v1200 = vadd.f32 0.0, %v1199
    %v1201 = vpop.f32.mrb[0].mxu0
    %v1202 = vadd.f32 0.0, %v1201
    %v1203 = vpop.f32.mrb[0].mxu0
    %v1204 = vadd.f32 0.0, %v1203
    %v1205 = vpop.f32.mrb[0].mxu0
    %v1206 = vadd.f32 0.0, %v1205
    %1207 = vmatprep.mubr.bf16.mxu0 %v639
    %1208 = vmatmul.mubr.bf16.gmra.mrb[0].mxu0 %v638
    %v1209 = vpop.f32.mrb[0].mxu0
    %v1210 = vadd.f32 0.0, %v1209
    %v1211 = vpop.f32.mrb[0].mxu0
    %v1212 = vadd.f32 0.0, %v1211
    %v1213 = vpop.f32.mrb[0].mxu0
    %v1214 = vadd.f32 0.0, %v1213
    %v1215 = vpop.f32.mrb[0].mxu0
    %v1216 = vadd.f32 0.0, %v1215
    %1217 = vmatprep.mubr.bf16.mxu0 %v641
    %1218 = vmatmul.mubr.bf16.gmra.mrb[0].mxu0 %v640
    %v1219 = vpop.f32.mrb[0].mxu0
    %v1220 = vadd.f32 0.0, %v1219
    %v1221 = vpop.f32.mrb[0].mxu0
    %v1222 = vadd.f32 0.0, %v1221
    %v1223 = vpop.f32.mrb[0].mxu0
    %v1224 = vadd.f32 0.0, %v1223
    %v1225 = vpop.f32.mrb[0].mxu0
    %v1226 = vadd.f32 0.0, %v1225
    %1227 = vmatprep.mubr.bf16.mxu0 %v643
    %1228 = vmatmul.mubr.bf16.gmra.mrb[0].mxu0 %v642
    %v1229 = vpop.f32.mrb[0].mxu0
    %v1230 = vadd.f32 0.0, %v1229
    %v1231 = vpop.f32.mrb[0].mxu0
    %v1232 = vadd.f32 0.0, %v1231
    %v1233 = vpop.f32.mrb[0].mxu0
    %v1234 = vadd.f32 0.0, %v1233
    %v1235 = vpop.f32.mrb[0].mxu0
    %v1236 = vadd.f32 0.0, %v1235
    %1237 = vmatprep.mubr.bf16.mxu0 %v645
    %1238 = vmatmul.mubr.bf16.gmra.mrb[0].mxu0 %v644
    %v1239 = vpop.f32.mrb[0].mxu0
    %v1240 = vadd.f32 0.0, %v1239
    %v1241 = vpop.f32.mrb[0].mxu0
    %v1242 = vadd.f32 0.0, %v1241
    %v1243 = vpop.f32.mrb[0].mxu0
    %v1244 = vadd.f32 0.0, %v1243
    %v1245 = vpop.f32.mrb[0].mxu0
    %v1246 = vadd.f32 0.0, %v1245
    %1247 = vmatprep.mubr.bf16.mxu0 %v647
    %1248 = vmatmul.mubr.bf16.gmra.mrb[0].mxu0 %v646
    %v1249 = vpop.f32.mrb[0].mxu0
    %v1250 = vadd.f32 0.0, %v1249
    %v1251 = vpop.f32.mrb[0].mxu0
    %v1252 = vadd.f32 0.0, %v1251
    %v1253 = vpop.f32.mrb[0].mxu0
    %v1254 = vadd.f32 0.0, %v1253
    %v1255 = vpop.f32.mrb[0].mxu0
    %v1256 = vadd.f32 0.0, %v1255
    %1257 = vdwg.mxu0
    %v1258 = vpack.c.bf16 %v1071, %v1067
    %v1259 = vpack.c.bf16 %v1073, %v1069
    %v1260 = vpack.c.bf16 %v1184, %v1180
    %v1261 = vpack.c.bf16 %v1186, %v1182
    %v1262 = vpack.c.bf16 %v1081, %v1077
    %v1263 = vpack.c.bf16 %v1083, %v1079
    %v1264 = vpack.c.bf16 %v1194, %v1190
    %v1265 = vpack.c.bf16 %v1196, %v1192
    %v1266 = vpack.c.bf16 %v1091, %v1087
    %v1267 = vpack.c.bf16 %v1093, %v1089
    %v1268 = vpack.c.bf16 %v1204, %v1200
    %v1269 = vpack.c.bf16 %v1206, %v1202
    %v1270 = vpack.c.bf16 %v1101, %v1097
    %v1271 = vpack.c.bf16 %v1103, %v1099
    %v1272 = vpack.c.bf16 %v1214, %v1210
    %v1273 = vpack.c.bf16 %v1216, %v1212
    %v1274 = vpack.c.bf16 %v1111, %v1107
    %v1275 = vpack.c.bf16 %v1113, %v1109
    %v1276 = vpack.c.bf16 %v1224, %v1220
    %v1277 = vpack.c.bf16 %v1226, %v1222
    %v1278 = vpack.c.bf16 %v1121, %v1117
    %v1279 = vpack.c.bf16 %v1123, %v1119
    %v1280 = vpack.c.bf16 %v1234, %v1230
    %v1281 = vpack.c.bf16 %v1236, %v1232
    %v1282 = vpack.c.bf16 %v1131, %v1127
    %v1283 = vpack.c.bf16 %v1133, %v1129
    %v1284 = vpack.c.bf16 %v1244, %v1240
    %v1285 = vpack.c.bf16 %v1246, %v1242
    %v1286 = vpack.c.bf16 %v1141, %v1137
    %v1287 = vpack.c.bf16 %v1143, %v1139
    %v1288 = vpack.c.bf16 %v1254, %v1250
    %v1289 = vpack.c.bf16 %v1256, %v1252
    %v1290 = vld [vmem:[%s6] sm:$0xf]
    %v1293 = vunpack.c.l.s4 1966171168
    %v1294 = vunpack.c.0.s8 %v1293
    %v1295 = vlaneseq
    %v1296 = vshrl.u32 %v1295, 7
    %v1297 = vsub.s32 %v1294, %v1296
    %v1298 = vrot.slane %v1290, %v1297
    %v1299 = vcombine.high %v1298, %v1298
    %v1301 = vunpack.c.l.s4 1966171168
    %v1302 = vunpack.c.0.s8 %v1301
    %v1303 = vlaneseq
    %v1304 = vshrl.u32 %v1303, 7
    %v1305 = vsub.s32 %v1302, %v1304
    %v1306 = vrot.slane %v1298, %v1305
    %v1308 = vunpack.c.l.s4 1966171168
    %v1309 = vunpack.c.0.s8 %v1308
    %v1310 = vlaneseq
    %v1311 = vshrl.u32 %v1310, 7
    %v1312 = vsub.s32 %v1309, %v1311
    %v1313 = vrot.slane %v1299, %v1312
    %v1314 = vcombine.high %v1306, %v1306
    %v1315 = vcombine.high %v1313, %v1313
    %v1317 = vpack.i.b16 %v1306, %v1306
    %v1319 = vlaneseq
    %v1320 = vshrl.u32 %v1319, 7
    %v1321 = vsub.s32 0, %v1320
    %v1322 = vrot.slane %v1317, %v1321
    %v1324 = vpack.i.b16 %v1313, %v1313
    %v1326 = vlaneseq
    %v1327 = vshrl.u32 %v1326, 7
    %v1328 = vsub.s32 0, %v1327
    %v1329 = vrot.slane %v1324, %v1328
    %v1331 = vpack.i.b16 %v1314, %v1314
    %v1333 = vlaneseq
    %v1334 = vshrl.u32 %v1333, 7
    %v1335 = vsub.s32 0, %v1334
    %v1336 = vrot.slane %v1331, %v1335
    %v1338 = vpack.i.b16 %v1315, %v1315
    %v1340 = vlaneseq
    %v1341 = vshrl.u32 %v1340, 7
    %v1342 = vsub.s32 0, %v1341
    %v1343 = vrot.slane %v1338, %v1342
    %v1344 = vadd.bf16 %v1258, %v1322
    %v1345 = vadd.bf16 %v1259, %v1329
    %v1346 = vadd.bf16 %v1260, %v1336
    %v1347 = vadd.bf16 %v1261, %v1343
    %v1348 = vadd.bf16 %v1262, %v1322
    %v1349 = vadd.bf16 %v1263, %v1329
    %v1350 = vadd.bf16 %v1264, %v1336
    %v1351 = vadd.bf16 %v1265, %v1343
    %v1352 = vadd.bf16 %v1266, %v1322
    %v1353 = vadd.bf16 %v1267, %v1329
    %v1354 = vadd.bf16 %v1268, %v1336
    %v1355 = vadd.bf16 %v1269, %v1343
    %v1356 = vadd.bf16 %v1270, %v1322
    %v1357 = vadd.bf16 %v1271, %v1329
    %v1358 = vadd.bf16 %v1272, %v1336
    %v1359 = vadd.bf16 %v1273, %v1343
    %v1360 = vadd.bf16 %v1274, %v1322
    %v1361 = vadd.bf16 %v1275, %v1329
    %v1362 = vadd.bf16 %v1276, %v1336
    %v1363 = vadd.bf16 %v1277, %v1343
    %v1364 = vadd.bf16 %v1278, %v1322
    %v1365 = vadd.bf16 %v1279, %v1329
    %v1366 = vadd.bf16 %v1280, %v1336
    %v1367 = vadd.bf16 %v1281, %v1343
    %v1368 = vadd.bf16 %v1282, %v1322
    %v1369 = vadd.bf16 %v1283, %v1329
    %v1370 = vadd.bf16 %v1284, %v1336
    %v1371 = vadd.bf16 %v1285, %v1343
    %v1372 = vadd.bf16 %v1286, %v1322
    %v1373 = vadd.bf16 %v1287, %v1329
    %v1374 = vadd.bf16 %v1288, %v1336
    %v1375 = vadd.bf16 %v1289, %v1343
    %vm1376 = vcmp.ge.bf16.partialorder %v1344, 0
    %vm1377 = vcmp.ge.bf16.partialorder %v1345, 0
    %vm1378 = vcmp.ge.bf16.partialorder %v1346, 0
    %vm1379 = vcmp.ge.bf16.partialorder %v1347, 0
    %vm1380 = vcmp.ge.bf16.partialorder %v1348, 0
    %vm1381 = vcmp.ge.bf16.partialorder %v1349, 0
    %vm1382 = vcmp.ge.bf16.partialorder %v1350, 0
    %vm1383 = vcmp.ge.bf16.partialorder %v1351, 0
    %vm1384 = vcmp.ge.bf16.partialorder %v1352, 0
    %vm1385 = vcmp.ge.bf16.partialorder %v1353, 0
    %vm1386 = vcmp.ge.bf16.partialorder %v1354, 0
    %vm1387 = vcmp.ge.bf16.partialorder %v1355, 0
    %vm1388 = vcmp.ge.bf16.partialorder %v1356, 0
    %vm1389 = vcmp.ge.bf16.partialorder %v1357, 0
    %vm1390 = vcmp.ge.bf16.partialorder %v1358, 0
    %vm1391 = vcmp.ge.bf16.partialorder %v1359, 0
    %vm1392 = vcmp.ge.bf16.partialorder %v1360, 0
    %vm1393 = vcmp.ge.bf16.partialorder %v1361, 0
    %vm1394 = vcmp.ge.bf16.partialorder %v1362, 0
    %vm1395 = vcmp.ge.bf16.partialorder %v1363, 0
    %vm1396 = vcmp.ge.bf16.partialorder %v1364, 0
    %vm1397 = vcmp.ge.bf16.partialorder %v1365, 0
    %vm1398 = vcmp.ge.bf16.partialorder %v1366, 0
    %vm1399 = vcmp.ge.bf16.partialorder %v1367, 0
    %vm1400 = vcmp.ge.bf16.partialorder %v1368, 0
    %vm1401 = vcmp.ge.bf16.partialorder %v1369, 0
    %vm1402 = vcmp.ge.bf16.partialorder %v1370, 0
    %vm1403 = vcmp.ge.bf16.partialorder %v1371, 0
    %vm1404 = vcmp.ge.bf16.partialorder %v1372, 0
    %vm1405 = vcmp.ge.bf16.partialorder %v1373, 0
    %vm1406 = vcmp.ge.bf16.partialorder %v1374, 0
    %vm1407 = vcmp.ge.bf16.partialorder %v1375, 0
    %v1408 = vmul.bf16 %v1344, 1009007652
    %v1409 = vmul.bf16 %v1345, 1009007652
    %v1410 = vmul.bf16 %v1346, 1009007652
    %v1411 = vmul.bf16 %v1347, 1009007652
    %v1412 = vmul.bf16 %v1348, 1009007652
    %v1413 = vmul.bf16 %v1349, 1009007652
    %v1414 = vmul.bf16 %v1350, 1009007652
    %v1415 = vmul.bf16 %v1351, 1009007652
    %v1416 = vmul.bf16 %v1352, 1009007652
    %v1417 = vmul.bf16 %v1353, 1009007652
    %v1418 = vmul.bf16 %v1354, 1009007652
    %v1419 = vmul.bf16 %v1355, 1009007652
    %v1420 = vmul.bf16 %v1356, 1009007652
    %v1421 = vmul.bf16 %v1357, 1009007652
    %v1422 = vmul.bf16 %v1358, 1009007652
    %v1423 = vmul.bf16 %v1359, 1009007652
    %v1424 = vmul.bf16 %v1360, 1009007652
    %v1425 = vmul.bf16 %v1361, 1009007652
    %v1426 = vmul.bf16 %v1362, 1009007652
    %v1427 = vmul.bf16 %v1363, 1009007652
    %v1428 = vmul.bf16 %v1364, 1009007652
    %v1429 = vmul.bf16 %v1365, 1009007652
    %v1430 = vmul.bf16 %v1366, 1009007652
    %v1431 = vmul.bf16 %v1367, 1009007652
    %v1432 = vmul.bf16 %v1368, 1009007652
    %v1433 = vmul.bf16 %v1369, 1009007652
    %v1434 = vmul.bf16 %v1370, 1009007652
    %v1435 = vmul.bf16 %v1371, 1009007652
    %v1436 = vmul.bf16 %v1372, 1009007652
    %v1437 = vmul.bf16 %v1373, 1009007652
    %v1438 = vmul.bf16 %v1374, 1009007652
    %v1439 = vmul.bf16 %v1375, 1009007652
    %v1440 = vsel %vm1376, %v1344, %v1408
    %v1441 = vsel %vm1377, %v1345, %v1409
    %v1442 = vsel %vm1378, %v1346, %v1410
    %v1443 = vsel %vm1379, %v1347, %v1411
    %v1444 = vsel %vm1380, %v1348, %v1412
    %v1445 = vsel %vm1381, %v1349, %v1413
    %v1446 = vsel %vm1382, %v1350, %v1414
    %v1447 = vsel %vm1383, %v1351, %v1415
    %v1448 = vsel %vm1384, %v1352, %v1416
    %v1449 = vsel %vm1385, %v1353, %v1417
    %v1450 = vsel %vm1386, %v1354, %v1418
    %v1451 = vsel %vm1387, %v1355, %v1419
    %v1452 = vsel %vm1388, %v1356, %v1420
    %v1453 = vsel %vm1389, %v1357, %v1421
    %v1454 = vsel %vm1390, %v1358, %v1422
    %v1455 = vsel %vm1391, %v1359, %v1423
    %v1456 = vsel %vm1392, %v1360, %v1424
    %v1457 = vsel %vm1393, %v1361, %v1425
    %v1458 = vsel %vm1394, %v1362, %v1426
    %v1459 = vsel %vm1395, %v1363, %v1427
    %v1460 = vsel %vm1396, %v1364, %v1428
    %v1461 = vsel %vm1397, %v1365, %v1429
    %v1462 = vsel %vm1398, %v1366, %v1430
    %v1463 = vsel %vm1399, %v1367, %v1431
    %v1464 = vsel %vm1400, %v1368, %v1432
    %v1465 = vsel %vm1401, %v1369, %v1433
    %v1466 = vsel %vm1402, %v1370, %v1434
    %v1467 = vsel %vm1403, %v1371, %v1435
    %v1468 = vsel %vm1404, %v1372, %v1436
    %v1469 = vsel %vm1405, %v1373, %v1437
    %v1470 = vsel %vm1406, %v1374, %v1438
    %v1471 = vsel %vm1407, %v1375, %v1439
    %v1472 = vld [vmem:[#allocation7] sm:$0xf]
    %v1473 = vld [vmem:[#allocation7 + $0x4] sm:$0xf]
    %v1474 = vld [vmem:[#allocation7 + $0x8] sm:$0xf]
    %v1475 = vld [vmem:[#allocation7 + $0xc] sm:$0xf]
    %v1476 = vld [vmem:[#allocation7 + $0x10] sm:$0xf]
    %v1477 = vld [vmem:[#allocation7 + $0x14] sm:$0xf]
    %v1478 = vld [vmem:[#allocation7 + $0x18] sm:$0xf]
    %v1479 = vld [vmem:[#allocation7 + $0x1c] sm:$0xf]
    %v1480 = vld [vmem:[#allocation7 + $0x20] sm:$0xf]
    %v1481 = vld [vmem:[#allocation7 + $0x24] sm:$0xf]
    %v1482 = vld [vmem:[#allocation7 + $0x28] sm:$0xf]
    %v1483 = vld [vmem:[#allocation7 + $0x2c] sm:$0xf]
    %v1484 = vld [vmem:[#allocation7 + $0x30] sm:$0xf]
    %v1485 = vld [vmem:[#allocation7 + $0x34] sm:$0xf]
    %v1486 = vld [vmem:[#allocation7 + $0x38] sm:$0xf]
    %v1487 = vld [vmem:[#allocation7 + $0x3c] sm:$0xf]
    %v1488 = vld [vmem:[#allocation7 + $0x40] sm:$0xf]
    %v1489 = vld [vmem:[#allocation7 + $0x44] sm:$0xf]
    %v1490 = vld [vmem:[#allocation7 + $0x48] sm:$0xf]
    %v1491 = vld [vmem:[#allocation7 + $0x4c] sm:$0xf]
    %v1492 = vld [vmem:[#allocation7 + $0x50] sm:$0xf]
    %v1493 = vld [vmem:[#allocation7 + $0x54] sm:$0xf]
    %v1494 = vld [vmem:[#allocation7 + $0x58] sm:$0xf]
    %v1495 = vld [vmem:[#allocation7 + $0x5c] sm:$0xf]
    %v1496 = vld [vmem:[#allocation7 + $0x60] sm:$0xf]
    %v1497 = vld [vmem:[#allocation7 + $0x64] sm:$0xf]
    %v1498 = vld [vmem:[#allocation7 + $0x68] sm:$0xf]
    %v1499 = vld [vmem:[#allocation7 + $0x6c] sm:$0xf]
    %v1500 = vld [vmem:[#allocation7 + $0x70] sm:$0xf]
    %v1501 = vld [vmem:[#allocation7 + $0x74] sm:$0xf]
    %v1502 = vld [vmem:[#allocation7 + $0x78] sm:$0xf]
    %v1503 = vld [vmem:[#allocation7 + $0x7c] sm:$0xf]
    %v1504 = vld [vmem:[#allocation7 + $0x80] sm:$0xf]
    %v1505 = vld [vmem:[#allocation7 + $0x84] sm:$0xf]
    %v1506 = vld [vmem:[#allocation7 + $0x88] sm:$0xf]
    %v1507 = vld [vmem:[#allocation7 + $0x8c] sm:$0xf]
    %v1508 = vld [vmem:[#allocation7 + $0x90] sm:$0xf]
    %v1509 = vld [vmem:[#allocation7 + $0x94] sm:$0xf]
    %v1510 = vld [vmem:[#allocation7 + $0x98] sm:$0xf]
    %v1511 = vld [vmem:[#allocation7 + $0x9c] sm:$0xf]
    %v1512 = vld [vmem:[#allocation7 + $0xa0] sm:$0xf]
    %v1513 = vld [vmem:[#allocation7 + $0xa4] sm:$0xf]
    %v1514 = vld [vmem:[#allocation7 + $0xa8] sm:$0xf]
    %v1515 = vld [vmem:[#allocation7 + $0xac] sm:$0xf]
    %v1516 = vld [vmem:[#allocation7 + $0xb0] sm:$0xf]
    %v1517 = vld [vmem:[#allocation7 + $0xb4] sm:$0xf]
    %v1518 = vld [vmem:[#allocation7 + $0xb8] sm:$0xf]
    %v1519 = vld [vmem:[#allocation7 + $0xbc] sm:$0xf]
    %v1520 = vld [vmem:[#allocation7 + $0xc0] sm:$0xf]
    %v1521 = vld [vmem:[#allocation7 + $0xc4] sm:$0xf]
    %v1522 = vld [vmem:[#allocation7 + $0xc8] sm:$0xf]
    %v1523 = vld [vmem:[#allocation7 + $0xcc] sm:$0xf]
    %v1524 = vld [vmem:[#allocation7 + $0xd0] sm:$0xf]
    %v1525 = vld [vmem:[#allocation7 + $0xd4] sm:$0xf]
    %v1526 = vld [vmem:[#allocation7 + $0xd8] sm:$0xf]
    %v1527 = vld [vmem:[#allocation7 + $0xdc] sm:$0xf]
    %v1528 = vld [vmem:[#allocation7 + $0xe0] sm:$0xf]
    %v1529 = vld [vmem:[#allocation7 + $0xe4] sm:$0xf]
    %v1530 = vld [vmem:[#allocation7 + $0xe8] sm:$0xf]
    %v1531 = vld [vmem:[#allocation7 + $0xec] sm:$0xf]
    %v1532 = vld [vmem:[#allocation7 + $0xf0] sm:$0xf]
    %v1533 = vld [vmem:[#allocation7 + $0xf4] sm:$0xf]
    %v1534 = vld [vmem:[#allocation7 + $0xf8] sm:$0xf]
    %v1535 = vld [vmem:[#allocation7 + $0xfc] sm:$0xf]
    %v1536 = vld [vmem:[%s8] sm:$0x1]
    %v1538 = vlaneseq
    %v1539 = vshrl.u32 %v1538, 7
    %v1540 = vsub.s32 0, %v1539
    %v1541 = vrot.slane %v1536, %v1540
    %v1607 = vunpack.c.l.b16 %v1472
    %v1608 = vunpack.c.l.b16 %v1473
    %v1609 = vunpack.c.l.b16 %v1474
    %v1610 = vunpack.c.l.b16 %v1475
    %v1611 = vunpack.c.l.b16 %v1476
    %v1612 = vunpack.c.l.b16 %v1477
    %v1613 = vunpack.c.l.b16 %v1478
    %v1614 = vunpack.c.l.b16 %v1479
    %v1615 = vunpack.c.l.b16 %v1480
    %v1616 = vunpack.c.l.b16 %v1481
    %v1617 = vunpack.c.l.b16 %v1482
    %v1618 = vunpack.c.l.b16 %v1483
    %v1619 = vunpack.c.l.b16 %v1484
    %v1620 = vunpack.c.l.b16 %v1485
    %v1621 = vunpack.c.l.b16 %v1486
    %v1622 = vunpack.c.l.b16 %v1487
    %v1623 = vunpack.c.l.b16 %v1488
    %v1624 = vunpack.c.l.b16 %v1489
    %v1625 = vunpack.c.l.b16 %v1490
    %v1626 = vunpack.c.l.b16 %v1491
    %v1627 = vunpack.c.l.b16 %v1492
    %v1628 = vunpack.c.l.b16 %v1493
    %v1629 = vunpack.c.l.b16 %v1494
    %v1630 = vunpack.c.l.b16 %v1495
    %v1631 = vunpack.c.l.b16 %v1496
    %v1632 = vunpack.c.l.b16 %v1497
    %v1633 = vunpack.c.l.b16 %v1498
    %v1634 = vunpack.c.l.b16 %v1499
    %v1635 = vunpack.c.l.b16 %v1500
    %v1636 = vunpack.c.l.b16 %v1501
    %v1637 = vunpack.c.l.b16 %v1502
    %v1638 = vunpack.c.l.b16 %v1503
    %v1639 = vunpack.c.l.b16 %v1504
    %v1640 = vunpack.c.l.b16 %v1505
    %v1641 = vunpack.c.l.b16 %v1506
    %v1642 = vunpack.c.l.b16 %v1507
    %v1643 = vunpack.c.l.b16 %v1508
    %v1644 = vunpack.c.l.b16 %v1509
    %v1645 = vunpack.c.l.b16 %v1510
    %v1646 = vunpack.c.l.b16 %v1511
    %v1647 = vunpack.c.l.b16 %v1512
    %v1648 = vunpack.c.l.b16 %v1513
    %v1649 = vunpack.c.l.b16 %v1514
    %v1650 = vunpack.c.l.b16 %v1515
    %v1651 = vunpack.c.l.b16 %v1516
    %v1652 = vunpack.c.l.b16 %v1517
    %v1653 = vunpack.c.l.b16 %v1518
    %v1654 = vunpack.c.l.b16 %v1519
    %v1655 = vunpack.c.l.b16 %v1520
    %v1656 = vunpack.c.l.b16 %v1521
    %v1657 = vunpack.c.l.b16 %v1522
    %v1658 = vunpack.c.l.b16 %v1523
    %v1659 = vunpack.c.l.b16 %v1524
    %v1660 = vunpack.c.l.b16 %v1525
    %v1661 = vunpack.c.l.b16 %v1526
    %v1662 = vunpack.c.l.b16 %v1527
    %v1663 = vunpack.c.l.b16 %v1528
    %v1664 = vunpack.c.l.b16 %v1529
    %v1665 = vunpack.c.l.b16 %v1530
    %v1666 = vunpack.c.l.b16 %v1531
    %v1667 = vunpack.c.l.b16 %v1532
    %v1668 = vunpack.c.l.b16 %v1533
    %v1669 = vunpack.c.l.b16 %v1534
    %v1670 = vunpack.c.l.b16 %v1535
    %v1671 = vpack.c.b16 %v1608, %v1607
    %v1672 = vpack.c.b16 %v1610, %v1609
    %v1673 = vpack.c.b16 %v1612, %v1611
    %v1674 = vpack.c.b16 %v1614, %v1613
    %v1675 = vpack.c.b16 %v1616, %v1615
    %v1676 = vpack.c.b16 %v1618, %v1617
    %v1677 = vpack.c.b16 %v1620, %v1619
    %v1678 = vpack.c.b16 %v1622, %v1621
    %v1679 = vpack.c.b16 %v1624, %v1623
    %v1680 = vpack.c.b16 %v1626, %v1625
    %v1681 = vpack.c.b16 %v1628, %v1627
    %v1682 = vpack.c.b16 %v1630, %v1629
    %v1683 = vpack.c.b16 %v1632, %v1631
    %v1684 = vpack.c.b16 %v1634, %v1633
    %v1685 = vpack.c.b16 %v1636, %v1635
    %v1686 = vpack.c.b16 %v1638, %v1637
    %v1687 = vpack.c.b16 %v1640, %v1639
    %v1688 = vpack.c.b16 %v1642, %v1641
    %v1689 = vpack.c.b16 %v1644, %v1643
    %v1690 = vpack.c.b16 %v1646, %v1645
    %v1691 = vpack.c.b16 %v1648, %v1647
    %v1692 = vpack.c.b16 %v1650, %v1649
    %v1693 = vpack.c.b16 %v1652, %v1651
    %v1694 = vpack.c.b16 %v1654, %v1653
    %v1695 = vpack.c.b16 %v1656, %v1655
    %v1696 = vpack.c.b16 %v1658, %v1657
    %v1697 = vpack.c.b16 %v1660, %v1659
    %v1698 = vpack.c.b16 %v1662, %v1661
    %v1699 = vpack.c.b16 %v1664, %v1663
    %v1700 = vpack.c.b16 %v1666, %v1665
    %v1701 = vpack.c.b16 %v1668, %v1667
    %v1702 = vpack.c.b16 %v1670, %v1669
    %1735 = vmatprep.subr.bf16.mxu0 0
    %1736 = vmatpush1.bf16.msra.mxu0 %v1671
    %1737 = vmatprep.subr.bf16.mxu0 0
    %1738 = vmatpush1.bf16.msra.mxu0 %v1672
    %1739 = vmatprep.subr.bf16.mxu0 0
    %1740 = vmatpush1.bf16.msra.mxu0 %v1673
    %1741 = vmatprep.subr.bf16.mxu0 0
    %1742 = vmatpush1.bf16.msra.mxu0 %v1674
    %1743 = vmatprep.subr.bf16.mxu0 0
    %1744 = vmatpush1.bf16.msra.mxu0 %v1675
    %1745 = vmatprep.subr.bf16.mxu0 0
    %1746 = vmatpush1.bf16.msra.mxu0 %v1676
    %1747 = vmatprep.subr.bf16.mxu0 0
    %1748 = vmatpush1.bf16.msra.mxu0 %v1677
    %1749 = vmatprep.subr.bf16.mxu0 0
    %1750 = vmatpush1.bf16.msra.mxu0 %v1678
    %1751 = vmatprep.subr.bf16.mxu0 0
    %1752 = vmatpush1.bf16.msra.mxu0 %v1679
    %1753 = vmatprep.subr.bf16.mxu0 0
    %1754 = vmatpush1.bf16.msra.mxu0 %v1680
    %1755 = vmatprep.subr.bf16.mxu0 0
    %1756 = vmatpush1.bf16.msra.mxu0 %v1681
    %1757 = vmatprep.subr.bf16.mxu0 0
    %1758 = vmatpush1.bf16.msra.mxu0 %v1682
    %1759 = vmatprep.subr.bf16.mxu0 0
    %1760 = vmatpush1.bf16.msra.mxu0 %v1683
    %1761 = vmatprep.subr.bf16.mxu0 0
    %1762 = vmatpush1.bf16.msra.mxu0 %v1684
    %1763 = vmatprep.subr.bf16.mxu0 0
    %1764 = vmatpush1.bf16.msra.mxu0 %v1685
    %1765 = vmatprep.subr.bf16.mxu0 0
    %1766 = vmatpush1.bf16.msra.mxu0 %v1686
    %1767 = vmatprep.mubr.bf16.mxu0 %v1441
    %1768 = vmatmul.mubr.bf16.gmra.mrb[0].mxu0 %v1440
    %v1769 = vpop.f32.mrb[0].mxu0
    %v1770 = vadd.f32 %v1541, %v1769
    %v1771 = vpop.f32.mrb[0].mxu0
    %v1772 = vpop.f32.mrb[0].mxu0
    %v1773 = vadd.f32 %v1541, %v1772
    %v1774 = vpop.f32.mrb[0].mxu0
    %1775 = vmatprep.mubr.bf16.mxu0 %v1445
    %1776 = vmatmul.mubr.bf16.gmra.mrb[0].mxu0 %v1444
    %v1777 = vpop.f32.mrb[0].mxu0
    %v1778 = vadd.f32 %v1541, %v1777
    %v1779 = vpop.f32.mrb[0].mxu0
    %v1780 = vpop.f32.mrb[0].mxu0
    %v1781 = vadd.f32 %v1541, %v1780
    %v1782 = vpop.f32.mrb[0].mxu0
    %1783 = vmatprep.mubr.bf16.mxu0 %v1449
    %1784 = vmatmul.mubr.bf16.gmra.mrb[0].mxu0 %v1448
    %v1785 = vpop.f32.mrb[0].mxu0
    %v1786 = vadd.f32 %v1541, %v1785
    %v1787 = vpop.f32.mrb[0].mxu0
    %v1788 = vpop.f32.mrb[0].mxu0
    %v1789 = vadd.f32 %v1541, %v1788
    %v1790 = vpop.f32.mrb[0].mxu0
    %1791 = vmatprep.mubr.bf16.mxu0 %v1453
    %1792 = vmatmul.mubr.bf16.gmra.mrb[0].mxu0 %v1452
    %v1793 = vpop.f32.mrb[0].mxu0
    %v1794 = vadd.f32 %v1541, %v1793
    %v1795 = vpop.f32.mrb[0].mxu0
    %v1796 = vpop.f32.mrb[0].mxu0
    %v1797 = vadd.f32 %v1541, %v1796
    %v1798 = vpop.f32.mrb[0].mxu0
    %1799 = vmatprep.mubr.bf16.mxu0 %v1457
    %1800 = vmatmul.mubr.bf16.gmra.mrb[0].mxu0 %v1456
    %v1801 = vpop.f32.mrb[0].mxu0
    %v1802 = vadd.f32 %v1541, %v1801
    %v1803 = vpop.f32.mrb[0].mxu0
    %v1804 = vpop.f32.mrb[0].mxu0
    %v1805 = vadd.f32 %v1541, %v1804
    %v1806 = vpop.f32.mrb[0].mxu0
    %1807 = vmatprep.mubr.bf16.mxu0 %v1461
    %1808 = vmatmul.mubr.bf16.gmra.mrb[0].mxu0 %v1460
    %v1809 = vpop.f32.mrb[0].mxu0
    %v1810 = vadd.f32 %v1541, %v1809
    %v1811 = vpop.f32.mrb[0].mxu0
    %v1812 = vpop.f32.mrb[0].mxu0
    %v1813 = vadd.f32 %v1541, %v1812
    %v1814 = vpop.f32.mrb[0].mxu0
    %1815 = vmatprep.mubr.bf16.mxu0 %v1465
    %1816 = vmatmul.mubr.bf16.gmra.mrb[0].mxu0 %v1464
    %v1817 = vpop.f32.mrb[0].mxu0
    %v1818 = vadd.f32 %v1541, %v1817
    %v1819 = vpop.f32.mrb[0].mxu0
    %v1820 = vpop.f32.mrb[0].mxu0
    %v1821 = vadd.f32 %v1541, %v1820
    %v1822 = vpop.f32.mrb[0].mxu0
    %1823 = vmatprep.mubr.bf16.mxu0 %v1469
    %1824 = vmatmul.mubr.bf16.gmra.mrb[0].mxu0 %v1468
    %v1825 = vpop.f32.mrb[0].mxu0
    %v1826 = vadd.f32 %v1541, %v1825
    %v1827 = vpop.f32.mrb[0].mxu0
    %v1828 = vpop.f32.mrb[0].mxu0
    %v1829 = vadd.f32 %v1541, %v1828
    %v1830 = vpop.f32.mrb[0].mxu0
    %1831 = vdwg.mxu0
    %1832 = vmatprep.subr.bf16.mxu0 0
    %1833 = vmatpush1.bf16.msra.mxu0 %v1687
    %1834 = vmatprep.subr.bf16.mxu0 0
    %1835 = vmatpush1.bf16.msra.mxu0 %v1688
    %1836 = vmatprep.subr.bf16.mxu0 0
    %1837 = vmatpush1.bf16.msra.mxu0 %v1689
    %1838 = vmatprep.subr.bf16.mxu0 0
    %1839 = vmatpush1.bf16.msra.mxu0 %v1690
    %1840 = vmatprep.subr.bf16.mxu0 0
    %1841 = vmatpush1.bf16.msra.mxu0 %v1691
    %1842 = vmatprep.subr.bf16.mxu0 0
    %1843 = vmatpush1.bf16.msra.mxu0 %v1692
    %1844 = vmatprep.subr.bf16.mxu0 0
    %1845 = vmatpush1.bf16.msra.mxu0 %v1693
    %1846 = vmatprep.subr.bf16.mxu0 0
    %1847 = vmatpush1.bf16.msra.mxu0 %v1694
    %1848 = vmatprep.subr.bf16.mxu0 0
    %1849 = vmatpush1.bf16.msra.mxu0 %v1695
    %1850 = vmatprep.subr.bf16.mxu0 0
    %1851 = vmatpush1.bf16.msra.mxu0 %v1696
    %1852 = vmatprep.subr.bf16.mxu0 0
    %1853 = vmatpush1.bf16.msra.mxu0 %v1697
    %1854 = vmatprep.subr.bf16.mxu0 0
    %1855 = vmatpush1.bf16.msra.mxu0 %v1698
    %1856 = vmatprep.subr.bf16.mxu0 0
    %1857 = vmatpush1.bf16.msra.mxu0 %v1699
    %1858 = vmatprep.subr.bf16.mxu0 0
    %1859 = vmatpush1.bf16.msra.mxu0 %v1700
    %1860 = vmatprep.subr.bf16.mxu0 0
    %1861 = vmatpush1.bf16.msra.mxu0 %v1701
    %1862 = vmatprep.subr.bf16.mxu0 0
    %1863 = vmatpush1.bf16.msra.mxu0 %v1702
    %1864 = vmatprep.mubr.bf16.mxu0 %v1443
    %1865 = vmatmul.mubr.bf16.gmra.mrb[0].mxu0 %v1442
    %v1866 = vpop.f32.mrb[0].mxu0
    %v1867 = vadd.f32 %v1770, %v1866
    %v1868 = vpop.f32.mrb[0].mxu0
    %v1869 = vpop.f32.mrb[0].mxu0
    %v1870 = vadd.f32 %v1773, %v1869
    %v1871 = vpop.f32.mrb[0].mxu0
    %1872 = vmatprep.mubr.bf16.mxu0 %v1447
    %1873 = vmatmul.mubr.bf16.gmra.mrb[0].mxu0 %v1446
    %v1874 = vpop.f32.mrb[0].mxu0
    %v1875 = vadd.f32 %v1778, %v1874
    %v1876 = vpop.f32.mrb[0].mxu0
    %v1877 = vpop.f32.mrb[0].mxu0
    %v1878 = vadd.f32 %v1781, %v1877
    %v1879 = vpop.f32.mrb[0].mxu0
    %1880 = vmatprep.mubr.bf16.mxu0 %v1451
    %1881 = vmatmul.mubr.bf16.gmra.mrb[0].mxu0 %v1450
    %v1882 = vpop.f32.mrb[0].mxu0
    %v1883 = vadd.f32 %v1786, %v1882
    %v1884 = vpop.f32.mrb[0].mxu0
    %v1885 = vpop.f32.mrb[0].mxu0
    %v1886 = vadd.f32 %v1789, %v1885
    %v1887 = vpop.f32.mrb[0].mxu0
    %1888 = vmatprep.mubr.bf16.mxu0 %v1455
    %1889 = vmatmul.mubr.bf16.gmra.mrb[0].mxu0 %v1454
    %v1890 = vpop.f32.mrb[0].mxu0
    %v1891 = vadd.f32 %v1794, %v1890
    %v1892 = vpop.f32.mrb[0].mxu0
    %v1893 = vpop.f32.mrb[0].mxu0
    %v1894 = vadd.f32 %v1797, %v1893
    %v1895 = vpop.f32.mrb[0].mxu0
    %1896 = vmatprep.mubr.bf16.mxu0 %v1459
    %1897 = vmatmul.mubr.bf16.gmra.mrb[0].mxu0 %v1458
    %v1898 = vpop.f32.mrb[0].mxu0
    %v1899 = vadd.f32 %v1802, %v1898
    %v1900 = vpop.f32.mrb[0].mxu0
    %v1901 = vpop.f32.mrb[0].mxu0
    %v1902 = vadd.f32 %v1805, %v1901
    %v1903 = vpop.f32.mrb[0].mxu0
    %1904 = vmatprep.mubr.bf16.mxu0 %v1463
    %1905 = vmatmul.mubr.bf16.gmra.mrb[0].mxu0 %v1462
    %v1906 = vpop.f32.mrb[0].mxu0
    %v1907 = vadd.f32 %v1810, %v1906
    %v1908 = vpop.f32.mrb[0].mxu0
    %v1909 = vpop.f32.mrb[0].mxu0
    %v1910 = vadd.f32 %v1813, %v1909
    %v1911 = vpop.f32.mrb[0].mxu0
    %1912 = vmatprep.mubr.bf16.mxu0 %v1467
    %1913 = vmatmul.mubr.bf16.gmra.mrb[0].mxu0 %v1466
    %v1914 = vpop.f32.mrb[0].mxu0
    %v1915 = vadd.f32 %v1818, %v1914
    %v1916 = vpop.f32.mrb[0].mxu0
    %v1917 = vpop.f32.mrb[0].mxu0
    %v1918 = vadd.f32 %v1821, %v1917
    %v1919 = vpop.f32.mrb[0].mxu0
    %1920 = vmatprep.mubr.bf16.mxu0 %v1471
    %1921 = vmatmul.mubr.bf16.gmra.mrb[0].mxu0 %v1470
    %v1922 = vpop.f32.mrb[0].mxu0
    %v1923 = vadd.f32 %v1826, %v1922
    %v1924 = vpop.f32.mrb[0].mxu0
    %v1925 = vpop.f32.mrb[0].mxu0
    %v1926 = vadd.f32 %v1829, %v1925
    %v1927 = vpop.f32.mrb[0].mxu0
    %1928 = vdwg.mxu0
    %v1929 = vtanh.pop %v1867
    %v1930 = vtanh.pop %v1870
    %v1931 = vtanh.pop %v1875
    %v1932 = vtanh.pop %v1878
    %v1933 = vtanh.pop %v1883
    %v1934 = vtanh.pop %v1886
    %v1935 = vtanh.pop %v1891
    %v1936 = vtanh.pop %v1894
    %v1937 = vtanh.pop %v1899
    %v1938 = vtanh.pop %v1902
    %v1939 = vtanh.pop %v1907
    %v1940 = vtanh.pop %v1910
    %v1941 = vtanh.pop %v1915
    %v1942 = vtanh.pop %v1918
    %v1943 = vtanh.pop %v1923
    %v1944 = vtanh.pop %v1926
    %1945 = vst [vmem:[#allocation8] sm:$0xff] %v1929
    %1946 = vst [vmem:[#allocation8 + $0x8] sm:$0xff] %v1930
    %1947 = vst [vmem:[#allocation8 + $0x10] sm:$0xff] %v1931
    %1948 = vst [vmem:[#allocation8 + $0x18] sm:$0xff] %v1932
    %1949 = vst [vmem:[#allocation8 + $0x20] sm:$0xff] %v1933
    %1950 = vst [vmem:[#allocation8 + $0x28] sm:$0xff] %v1934
    %1951 = vst [vmem:[#allocation8 + $0x30] sm:$0xff] %v1935
    %1952 = vst [vmem:[#allocation8 + $0x38] sm:$0xff] %v1936
    %1953 = vst [vmem:[#allocation8 + $0x40] sm:$0xff] %v1937
    %1954 = vst [vmem:[#allocation8 + $0x48] sm:$0xff] %v1938
    %1955 = vst [vmem:[#allocation8 + $0x50] sm:$0xff] %v1939
    %1956 = vst [vmem:[#allocation8 + $0x58] sm:$0xff] %v1940
    %1957 = vst [vmem:[#allocation8 + $0x60] sm:$0xff] %v1941
    %1958 = vst [vmem:[#allocation8 + $0x68] sm:$0xff] %v1942
    %1959 = vst [vmem:[#allocation8 + $0x70] sm:$0xff] %v1943
    %1960 = vst [vmem:[#allocation8 + $0x78] sm:$0xff] %v1944
    // Predicated region
    $region50: #{tpu_custom_call.1} parent=1 // pred_check
      _
    $region51: #{tpu_custom_call.1} parent=1 // pred_check_branch
      %1962 = sbr.rel (0) target = $region53
    $region52: #{tpu_custom_call.1} parent=1 // pred_region
      %s1964 = ssub.s32 2048, 2048
      %1965 = vsyncadd [#allocation4], %s1964
      %s1966 = sshll.u32 [#allocation8], 4
      %s1967 = int_to_ptr.vmem [resolvable:$true] %s1966
      %1972 = dma.vmem_to_hbm [thread:$0]  %s1967, 2048, %s9, [#allocation4], 128, 128, 8
    $region53: #{tpu_custom_call.1} parent=1 // pred_fallthru
      _
    // Predicated region
    $region54: #{tpu_custom_call.1} parent=1 // pred_check
      _
    $region55: #{tpu_custom_call.1} parent=1 // pred_check_branch
      %1974 = sbr.rel (0) target = $region57
    $region56: #{tpu_custom_call.1} parent=1 // pred_region
      %1975 = dma.done [#allocation4], 2048
    $region57: #{tpu_custom_call.1} parent=1 // pred_fallthru
      _
    %1976 = vsyncpa [#allocation3], 1
    %1977 = vsyncpa [#allocation6], 1
    %1978 = vsyncpa [#allocation4], 1

</llo_original>
